<compile_context>
chip_gen: v7x
topology: tpu7x:2x2x1
jax: 0.10.0
libtpu: 0.0.40
codegen_flags: <defaults>
</compile_context>

<pallas_src>
import functools

import jax
import jax.numpy as jnp
from jax.experimental import pallas as pl
from jax.experimental.pallas import tpu as pltpu

NFRAMES = 3
COLOR = 3
B = 2
CIN = COLOR * (NFRAMES - 1) * NFRAMES  # 18
CIN_PAD = 32                           # pad input channels 18 -> 32 (zero rows/cols)
LANES = 128
WIDE = 512
BM_MAX = 128                           # batch rows per grid step

# Narrow slab (bf16, 128 lanes): conv1 taps + final Linear.
RN_W1 = 0        # (32, 128)   conv1: position p -> lanes p*32:(p+1)*32, rows 18:32 zero
RN_WL = 32       # (512, 128)  linear: row p*128+c <- Wl[f, c*4+p], lanes NFRAMES:128 zero
NROWS_N = 544
# Wide slab (bf16, 512 lanes): block-diagonal 1x1 convs.
RW_W2 = 0        # (128, 512)  conv2 block-diag (only lanes 0:256 used)
RW_W3 = 128      # (256, 512)  conv3 block-diag
RW_W4 = 384      # (512, 512)  conv4 block-diag
NROWS_W = 896
# Bias slab (f32): rows = [b1 x4 | b2 x4 | b3 x4 | b4 x4 | bl | zero pad], 8 x 512.


# ----------------------------- Pallas kernel --------------------------------
def alignment_kernel(x_ref, wn_ref, ww_ref, b_ref, o_ref):
    # x_ref:  (BM, 32)        zero-padded flattened input block (H = W = 1)
    # wn_ref: (544, 128) bf16 narrow weight slab (conv1 + linear), VMEM-resident
    # ww_ref: (896, 512) bf16 wide weight slab (block-diag conv2/3/4), VMEM-resident
    # b_ref:  (8, 512)   f32  packed biases
    # o_ref:  (BM, 128)       lane-dense output; first NFRAMES lanes are real
    f32, bf16 = jnp.float32, jnp.bfloat16
    dot = functools.partial(jnp.dot, preferred_element_type=f32)

    b1 = b_ref[0:1, 0:LANES]      # (1,128) conv1 bias tiled over the 4 positions
    b2 = b_ref[1:2, 0:256]        # (1,256) conv2 bias tiled x4
    b3 = b_ref[2:3, :]            # (1,512) conv3 bias tiled x4
    b4 = b_ref[3:4, :]            # (1,512) conv4 bias tiled x4
    bl = b_ref[4:5, 0:LANES]      # (1,128) linear bias (lanes NFRAMES:128 zero)

    x = x_ref[...].astype(bf16)                                              # (BM, 32)

    # conv1: all 4 output spatial positions fused along lanes (p*32 + c).
    h = jnp.maximum(dot(x, wn_ref[RN_W1:RN_W1 + 32, :]) + b1, 0.0)           # (BM, 128)
    # conv2..conv4: block-diagonal weights keep the 4 positions lane-parallel.
    h = jnp.maximum(dot(h.astype(bf16), ww_ref[RW_W2:RW_W3, 0:256]) + b2, 0.0)  # (BM, 256)
    h = jnp.maximum(dot(h.astype(bf16), ww_ref[RW_W3:RW_W4, :]) + b3, 0.0)      # (BM, 512)
    h = jnp.maximum(dot(h.astype(bf16), ww_ref[RW_W4:NROWS_W, :]) + b4, 0.0)    # (BM, 512)

    # Lanes of h are already in the PyTorch flatten order (p*128 + c) for the Linear.
    y = dot(h.astype(bf16), wn_ref[RN_WL:NROWS_N, :]) + bl                      # (BM, 128)

    # sigmoid: exp + EUP-approx reciprocal (EUP slot is otherwise idle).
    o_ref[...] = pl.reciprocal(1.0 + jnp.exp(-y), approx=True)


# ------------------------- one-time weight packing ---------------------------
def pack_params(params):
    """Pack weights into bf16 slabs + f32 bias slab.  Call ONCE; reuse across calls."""
    f32, bf16 = jnp.float32, jnp.bfloat16

    # conv1: output position p = oh*2 + ow on a 1x1 padded input sees exactly the tap
    # W1[:, :, 1-oh, 1-ow].
    W1 = params["W1"].astype(f32)                       # (32, 18, 2, 2)
    taps = [(1, 1), (1, 0), (0, 1), (0, 0)]             # p = 0..3
    w1 = jnp.concatenate([W1[:, :, kh, kw].T for kh, kw in taps], axis=1)    # (18, 128)
    w1 = jnp.zeros((CIN_PAD, LANES), f32).at[:CIN, :].set(w1)                # (32, 128)

    # Linear: PyTorch flatten of (B,128,2,2) is index c*4 + p; our lanes are p*128 + c.
    wl_perm = (params["Wl"].astype(f32)
               .reshape(NFRAMES, 128, 4).transpose(2, 1, 0).reshape(512, NFRAMES))
    wl = jnp.zeros((512, LANES), f32).at[:, :NFRAMES].set(wl_perm)           # (512, 128)
    narrow = jnp.concatenate([w1, wl], axis=0).astype(bf16)                  # (544, 128)

    # Block-diagonal 1x1 convs: position p's channels map p*Cin -> p*Cout lanes.
    def blockdiag(w, n=4):
        r, c = w.shape
        out = jnp.zeros((n * r, n * c), f32)
        for p in range(n):
            out = out.at[p * r:(p + 1) * r, p * c:(p + 1) * c].set(w)
        return out

    w2bd = jnp.zeros((128, WIDE), f32).at[:, :256].set(
        blockdiag(params["W2"][:, :, 0, 0].T.astype(f32)))                   # (128, 512)
    w3bd = blockdiag(params["W3"][:, :, 0, 0].T.astype(f32))                 # (256, 512)
    w4bd = blockdiag(params["W4"][:, :, 0, 0].T.astype(f32))                 # (512, 512)
    wide = jnp.concatenate([w2bd, w3bd, w4bd], axis=0).astype(bf16)          # (896, 512)

    biases = jnp.zeros((8, WIDE), f32)
    biases = biases.at[0, :128].set(jnp.tile(params["b1"].astype(f32), 4))
    biases = biases.at[1, :256].set(jnp.tile(params["b2"].astype(f32), 4))
    biases = biases.at[2, :512].set(jnp.tile(params["b3"].astype(f32), 4))
    biases = biases.at[3, :512].set(jnp.tile(params["b4"].astype(f32), 4))
    biases = biases.at[4, :NFRAMES].set(params["bl"].astype(f32))

    assert narrow.shape == (NROWS_N, LANES) and wide.shape == (NROWS_W, WIDE)
    return narrow, wide, biases


# ------------------------------- forward wrapper ------------------------------
def _round_up(n, m):
    return (n + m - 1) // m * m


@jax.jit
def alignment_detector_forward(x, wn, ww, biases):
    """x: (B, m, t, c, 1, 1) with m=NFRAMES, t=NFRAMES-1, c=COLOR."""
    b = x.shape[0]
    bm = min(BM_MAX, _round_up(b, 8))      # rows per grid step (sublane-aligned)
    b_pad = _round_up(b, bm)

    x_flat = x.reshape(b, -1).astype(jnp.float32)        # 'b m t c h w -> b (m t c)'
    # TODO(synk): if the producer hands over a (b_pad, 32) lane-padded buffer (or
    # allow_input_fusion is enabled), this tiny pad op disappears from the graph.
    x_pad = jnp.zeros((b_pad, CIN_PAD), jnp.float32).at[:b, :CIN].set(x_flat)

    k_macs = 32 * 128 + 128 * 256 + 256 * 512 + 512 * 512 + 512 * 128
    cost = pl.CostEstimate(
        flops=2 * b_pad * k_macs,
        transcendentals=2 * b_pad * LANES,
        bytes_accessed=(NROWS_N * LANES + NROWS_W * WIDE) * 2   # bf16 slabs
        + 8 * WIDE * 4                                          # f32 biases
        + b_pad * (CIN_PAD + LANES) * 4)                        # in/out activations

    out = pl.pallas_call(
        alignment_kernel,
        out_shape=jax.ShapeDtypeStruct((b_pad, LANES), jnp.float32),
        grid=(b_pad // bm,),
        in_specs=[
            pl.BlockSpec((bm, CIN_PAD), lambda i: (i, 0)),      # batch-blocked input
            pl.BlockSpec((NROWS_N, LANES), lambda i: (0, 0)),   # weights: constant block
            pl.BlockSpec((NROWS_W, WIDE), lambda i: (0, 0)),    # index -> DMA'd once,
            pl.BlockSpec((8, WIDE), lambda i: (0, 0)),          # VMEM-resident all steps
        ],
        out_specs=pl.BlockSpec((bm, LANES), lambda i: (i, 0)),
        compiler_params=pltpu.CompilerParams(
            dimension_semantics=("parallel",)),                 # v7x: shard across 2 TCs
        cost_estimate=cost,
    )(x_pad, wn, ww, biases)
    return out[:b, :NFRAMES]


# ------------------------------- param init ----------------------------------
def init_params(key):
    """Deterministic parameter init (PyTorch-default-style uniform bounds)."""
    ks = jax.random.split(key, 10)

    def u(k, shape, fan_in):
        bound = 1.0 / (fan_in ** 0.5)
        return jax.random.uniform(k, shape, jnp.float32, -bound, bound)

    p = {}
    p["W1"] = u(ks[0], (32, CIN, 2, 2), CIN * 4)
    p["b1"] = u(ks[1], (32,), CIN * 4)
    p["W2"] = u(ks[2], (64, 32, 1, 1), 32)
    p["b2"] = u(ks[3], (64,), 32)
    p["W3"] = u(ks[4], (128, 64, 1, 1), 64)
    p["b3"] = u(ks[5], (128,), 64)
    p["W4"] = u(ks[6], (128, 128, 1, 1), 128)
    p["b4"] = u(ks[7], (128,), 128)
    p["Wl"] = u(ks[8], (NFRAMES, 128 * 2 * 2), 512)
    p["bl"] = u(ks[9], (NFRAMES,), 512)
    return p


# ------------------------------ pure-JAX reference ---------------------------
def reference_forward(x, params):
    b = x.shape[0]
    xr = x.reshape(b, CIN, 1, 1).astype(jnp.float32)

    def conv_relu(inp, W, bias, pad):
        y = jax.lax.conv_general_dilated(
            inp, W, window_strides=(1, 1),
            padding=((pad, pad), (pad, pad)),
            dimension_numbers=("NCHW", "OIHW", "NCHW"))
        return jnp.maximum(y + bias[None, :, None, None], 0.0)

    y = conv_relu(xr, params["W1"], params["b1"], 1)   # (B, 32, 2, 2)
    y = conv_relu(y, params["W2"], params["b2"], 0)    # (B, 64, 2, 2)
    y = conv_relu(y, params["W3"], params["b3"], 0)    # (B, 128, 2, 2)
    y = conv_relu(y, params["W4"], params["b4"], 0)    # (B, 128, 2, 2)
    y = y.reshape(b, -1)                               # (B, 512)
    y = y @ params["Wl"].T + params["bl"][None, :]
    return jax.nn.sigmoid(y)


if __name__ == "__main__":
    key = jax.random.PRNGKey(0)
    kx, kp = jax.random.split(key)

    # x: (b, m, t, c, h, w) = (2, nframes, nframes-1, color, 1, 1)
    x = jax.random.normal(kx, (B, NFRAMES, NFRAMES - 1, COLOR, 1, 1), jnp.float32)
    params = init_params(kp)

    # Pack weights ONCE (hoisted out of the per-call hot path).
    wn, ww, biases = jax.block_until_ready(pack_params(params))

    out = alignment_detector_forward(x, wn, ww, biases)
    out = jax.block_until_ready(out)

    ref = jax.block_until_ready(reference_forward(x, params))
    assert out.shape == (B, NFRAMES)
    # bf16 weight slab + bf16 matmul inputs (f32 accumulation): loosened tolerance.
    assert jnp.allclose(out, ref, atol=2e-2, rtol=2e-2), (out, ref)

    print("KERNEL_OK")
</pallas_src>

<mosaic_0001>
module attributes {stable_mosaic.version = 11 : i64} {
  func.func @alignment_kernel(%arg0: i32, %arg1: memref<8x32xf32, #tpu.memory_space<vmem>>, %arg2: memref<544x128xbf16, #tpu.memory_space<vmem>>, %arg3: memref<896x512xbf16, #tpu.memory_space<vmem>>, %arg4: memref<8x512xf32, #tpu.memory_space<vmem>>, %arg5: memref<8x128xf32, #tpu.memory_space<vmem>>) attributes {dimension_semantics = [#tpu.dimension_semantics<parallel>], iteration_bounds = array<i64: 1>, scalar_prefetch = 0 : i64, scratch_operands = 0 : i64, tpu.core_type = #tpu.core_type<tc>, window_params = [{transform_indices = @transform_0, window_bounds = array<i64: 8, 32>}, {pipeline_mode = #tpu.pipeline_mode<synchronous>, transform_indices = @transform_1, window_bounds = array<i64: 544, 128>}, {pipeline_mode = #tpu.pipeline_mode<synchronous>, transform_indices = @transform_2, window_bounds = array<i64: 896, 512>}, {pipeline_mode = #tpu.pipeline_mode<synchronous>, transform_indices = @transform_3, window_bounds = array<i64: 8, 512>}, {transform_indices = @transform_4, window_bounds = array<i64: 8, 128>}]} {
    %c0 = arith.constant 0 : index
    %c0_0 = arith.constant 0 : index
    %0 = vector.load %arg4[%c0, %c0_0] : memref<8x512xf32, #tpu.memory_space<vmem>>, vector<1x128xf32>
    %c1 = arith.constant 1 : index
    %c0_1 = arith.constant 0 : index
    %1 = vector.load %arg4[%c1, %c0_1] : memref<8x512xf32, #tpu.memory_space<vmem>>, vector<1x256xf32>
    %c2 = arith.constant 2 : index
    %c0_2 = arith.constant 0 : index
    %2 = vector.load %arg4[%c2, %c0_2] : memref<8x512xf32, #tpu.memory_space<vmem>>, vector<1x512xf32>
    %c3 = arith.constant 3 : index
    %c0_3 = arith.constant 0 : index
    %3 = vector.load %arg4[%c3, %c0_3] : memref<8x512xf32, #tpu.memory_space<vmem>>, vector<1x512xf32>
    %c4 = arith.constant 4 : index
    %c0_4 = arith.constant 0 : index
    %4 = vector.load %arg4[%c4, %c0_4] : memref<8x512xf32, #tpu.memory_space<vmem>>, vector<1x128xf32>
    %c0_5 = arith.constant 0 : index
    %c0_6 = arith.constant 0 : index
    %5 = vector.load %arg1[%c0_5, %c0_6] : memref<8x32xf32, #tpu.memory_space<vmem>>, vector<8x32xf32>
    %6 = arith.truncf %5 : vector<8x32xf32> to vector<8x32xbf16>
    %c0_7 = arith.constant 0 : index
    %c0_8 = arith.constant 0 : index
    %7 = vector.load %arg2[%c0_7, %c0_8] : memref<544x128xbf16, #tpu.memory_space<vmem>>, vector<32x128xbf16>
    %cst = arith.constant dense<0.000000e+00> : vector<8x128xf32>
    %8 = tpu.matmul %6, %7, %cst {dimension_numbers = #tpu.dot_dimension_numbers<[1], [0], [0], [1], [0, 0, 1, 1], [], []>} : vector<8x32xbf16>, vector<32x128xbf16>, vector<8x128xf32> -> vector<8x128xf32>
    %9 = vector.broadcast %0 : vector<1x128xf32> to vector<8x128xf32>
    %10 = arith.addf %8, %9 : vector<8x128xf32>
    %cst_9 = arith.constant 0.000000e+00 : f32
    %11 = vector.broadcast %cst_9 : f32 to vector<8x128xf32>
    %12 = arith.maximumf %10, %11 : vector<8x128xf32>
    %13 = arith.truncf %12 : vector<8x128xf32> to vector<8x128xbf16>
    %c0_10 = arith.constant 0 : index
    %c0_11 = arith.constant 0 : index
    %14 = vector.load %arg3[%c0_10, %c0_11] : memref<896x512xbf16, #tpu.memory_space<vmem>>, vector<128x256xbf16>
    %cst_12 = arith.constant dense<0.000000e+00> : vector<8x256xf32>
    %15 = tpu.matmul %13, %14, %cst_12 {dimension_numbers = #tpu.dot_dimension_numbers<[1], [0], [0], [1], [0, 0, 1, 1], [], []>} : vector<8x128xbf16>, vector<128x256xbf16>, vector<8x256xf32> -> vector<8x256xf32>
    %16 = vector.broadcast %1 : vector<1x256xf32> to vector<8x256xf32>
    %17 = arith.addf %15, %16 : vector<8x256xf32>
    %cst_13 = arith.constant 0.000000e+00 : f32
    %18 = vector.broadcast %cst_13 : f32 to vector<8x256xf32>
    %19 = arith.maximumf %17, %18 : vector<8x256xf32>
    %20 = arith.truncf %19 : vector<8x256xf32> to vector<8x256xbf16>
    %c128 = arith.constant 128 : index
    %c0_14 = arith.constant 0 : index
    %21 = vector.load %arg3[%c128, %c0_14] : memref<896x512xbf16, #tpu.memory_space<vmem>>, vector<256x512xbf16>
    %cst_15 = arith.constant dense<0.000000e+00> : vector<8x512xf32>
    %22 = tpu.matmul %20, %21, %cst_15 {dimension_numbers = #tpu.dot_dimension_numbers<[1], [0], [0], [1], [0, 0, 1, 1], [], []>} : vector<8x256xbf16>, vector<256x512xbf16>, vector<8x512xf32> -> vector<8x512xf32>
    %23 = vector.broadcast %2 : vector<1x512xf32> to vector<8x512xf32>
    %24 = arith.addf %22, %23 : vector<8x512xf32>
    %cst_16 = arith.constant 0.000000e+00 : f32
    %25 = vector.broadcast %cst_16 : f32 to vector<8x512xf32>
    %26 = arith.maximumf %24, %25 : vector<8x512xf32>
    %27 = arith.truncf %26 : vector<8x512xf32> to vector<8x512xbf16>
    %c384 = arith.constant 384 : index
    %c0_17 = arith.constant 0 : index
    %28 = vector.load %arg3[%c384, %c0_17] : memref<896x512xbf16, #tpu.memory_space<vmem>>, vector<512x512xbf16>
    %cst_18 = arith.constant dense<0.000000e+00> : vector<8x512xf32>
    %29 = tpu.matmul %27, %28, %cst_18 {dimension_numbers = #tpu.dot_dimension_numbers<[1], [0], [0], [1], [0, 0, 1, 1], [], []>} : vector<8x512xbf16>, vector<512x512xbf16>, vector<8x512xf32> -> vector<8x512xf32>
    %30 = vector.broadcast %3 : vector<1x512xf32> to vector<8x512xf32>
    %31 = arith.addf %29, %30 : vector<8x512xf32>
    %cst_19 = arith.constant 0.000000e+00 : f32
    %32 = vector.broadcast %cst_19 : f32 to vector<8x512xf32>
    %33 = arith.maximumf %31, %32 : vector<8x512xf32>
    %34 = arith.truncf %33 : vector<8x512xf32> to vector<8x512xbf16>
    %c32 = arith.constant 32 : index
    %c0_20 = arith.constant 0 : index
    %35 = vector.load %arg2[%c32, %c0_20] : memref<544x128xbf16, #tpu.memory_space<vmem>>, vector<512x128xbf16>
    %cst_21 = arith.constant dense<0.000000e+00> : vector<8x128xf32>
    %36 = tpu.matmul %34, %35, %cst_21 {dimension_numbers = #tpu.dot_dimension_numbers<[1], [0], [0], [1], [0, 0, 1, 1], [], []>} : vector<8x512xbf16>, vector<512x128xbf16>, vector<8x128xf32> -> vector<8x128xf32>
    %37 = vector.broadcast %4 : vector<1x128xf32> to vector<8x128xf32>
    %38 = arith.addf %36, %37 : vector<8x128xf32>
    %cst_22 = arith.constant 0.000000e+00 : f32
    %39 = vector.broadcast %cst_22 : f32 to vector<8x128xf32>
    %40 = arith.subf %39, %38 : vector<8x128xf32>
    %41 = math.exp %40 : vector<8x128xf32>
    %cst_23 = arith.constant 1.000000e+00 : f32
    %42 = vector.broadcast %cst_23 : f32 to vector<8x128xf32>
    %43 = arith.addf %42, %41 : vector<8x128xf32>
    %44 = tpu.reciprocal %43 {approx = true} : vector<8x128xf32> -> vector<8x128xf32>
    %c0_24 = arith.constant 0 : index
    %c0_25 = arith.constant 0 : index
    %45 = vector.load %arg5[%c0_24, %c0_25] : memref<8x128xf32, #tpu.memory_space<vmem>>, vector<8x128xf32>
    tpu.vector_store %arg5[%c0_24, %c0_25], %44 {strides = array<i32>} : memref<8x128xf32, #tpu.memory_space<vmem>>, vector<8x128xf32>,
    return
  }
  func.func @transform_0(%arg0: i32) -> (i32, i32) {
    %c0_i32 = arith.constant 0 : i32
    %c0_i32_0 = arith.constant 0 : i32
    return %arg0, %c0_i32 : i32, i32
  }
  func.func @transform_1(%arg0: i32) -> (i32, i32) {
    %c0_i32 = arith.constant 0 : i32
    %c0_i32_0 = arith.constant 0 : i32
    %c0_i32_1 = arith.constant 0 : i32
    return %c0_i32, %c0_i32_0 : i32, i32
  }
  func.func @transform_2(%arg0: i32) -> (i32, i32) {
    %c0_i32 = arith.constant 0 : i32
    %c0_i32_0 = arith.constant 0 : i32
    %c0_i32_1 = arith.constant 0 : i32
    return %c0_i32, %c0_i32_0 : i32, i32
  }
  func.func @transform_3(%arg0: i32) -> (i32, i32) {
    %c0_i32 = arith.constant 0 : i32
    %c0_i32_0 = arith.constant 0 : i32
    %c0_i32_1 = arith.constant 0 : i32
    return %c0_i32, %c0_i32_0 : i32, i32
  }
  func.func @transform_4(%arg0: i32) -> (i32, i32) {
    %c0_i32 = arith.constant 0 : i32
    %c0_i32_0 = arith.constant 0 : i32
    return %arg0, %c0_i32 : i32, i32
  }
}

</mosaic_0001>

<llo_original>
// kernel: alignment_detector_forward.1
$region0: #{alignment_detector_forward.1}
  #allocation0 [shape = 'u32[]', space=smem, size = 0x4, offset = 0x4, fixed_abs, tag = 'smem constant byte address 0x4 - core index']
  #allocation1 [shape = 'u32[144,128]{1,0:T(1,128)}', space=vmem, size = 0x12000, scoped, tag = 'internal scratch']
  %s0 = inlined_call_operand.vmem [shape: f32[8,32], index: 0, kind: input, shape index: {}]
  %s1 = inlined_call_operand.hbm [shape: bf16[544,128], index: 1, kind: input, shape index: {}]
  %s2 = inlined_call_operand.hbm [shape: bf16[896,512], index: 2, kind: input, shape index: {}]
  %s3 = inlined_call_operand.vmem [shape: f32[8,512], index: 3, kind: input, shape index: {}]
  %s4 = inlined_call_operand.vmem [shape: f32[8,128], index: 4, kind: output, shape index: {}]
  %s5 = sld [smem:[#allocation0]]
  $region34: #{alignment_detector_forward.1} parent=0
    _
  %s7 = ssub.s32 1, %s5
  %s8 = scalar_select 0, %s7, %s5
  $region1: #{alignment_detector_forward.1} parent=0
    #allocation2 [shape = 'u8[139264]{0}', space=vmem, size = 0x22000, scoped, tag = 'input window, operand 1, single buffered']
    #allocation3 [shape = 's32[1]{0}', space=sflag, size = 0x4, scoped, tag = 'scoped memory for alignment_detector_forward.1']
    #allocation4 [shape = 'u8[917504]{0}', space=vmem, size = 0xe0000, scoped, tag = 'input window, operand 2, single buffered']
    #allocation5 [shape = 's32[1]{0}', space=sflag, size = 0x4, scoped, tag = 'scoped memory for alignment_detector_forward.1']
    %9 = vsyncpa [#allocation3], 0
    %10 = vsyncpa [#allocation5], 0
    // Predicated region
    $region2: #{alignment_detector_forward.1} parent=1 // pred_check
      _
    $region3: #{alignment_detector_forward.1} parent=1 // pred_check_branch
      %12 = sbr.rel (0) target = $region5
    $region4: #{alignment_detector_forward.1} parent=1 // pred_region
      _
    $region5: #{alignment_detector_forward.1} parent=1 // pred_fallthru
      _
    // Predicated region
    $region6: #{alignment_detector_forward.1} parent=1 // pred_check
      _
    $region7: #{alignment_detector_forward.1} parent=1 // pred_check_branch
      %14 = sbr.rel (0) target = $region9
    $region8: #{alignment_detector_forward.1} parent=1 // pred_region
      %s16 = ssub.s32 4352, 4352
      %17 = vsyncadd [#allocation3], %s16
      %s18 = sshll.u32 [#allocation2], 4
      %s19 = int_to_ptr.vmem [resolvable:$true] %s18
      %24 = dma.hbm_to_vmem [thread:$0]  %s1, 4352, %s19, [#allocation3], 64, 64, 4
    $region9: #{alignment_detector_forward.1} parent=1 // pred_fallthru
      _
    // Predicated region
    $region10: #{alignment_detector_forward.1} parent=1 // pred_check
      _
    $region11: #{alignment_detector_forward.1} parent=1 // pred_check_branch
      %26 = sbr.rel (0) target = $region13
    $region12: #{alignment_detector_forward.1} parent=1 // pred_region
      %s28 = ssub.s32 28672, 28672
      %29 = vsyncadd [#allocation5], %s28
      %s30 = sshll.u32 [#allocation4], 4
      %s31 = int_to_ptr.vmem [resolvable:$true] %s30
      %36 = dma.hbm_to_vmem [thread:$0]  %s2, 28672, %s31, [#allocation5], 256, 256, 16
    $region13: #{alignment_detector_forward.1} parent=1 // pred_fallthru
      _
    // Predicated region
    $region14: #{alignment_detector_forward.1} parent=1 // pred_check
      _
    $region15: #{alignment_detector_forward.1} parent=1 // pred_check_branch
      %38 = sbr.rel (0) target = $region17
    $region16: #{alignment_detector_forward.1} parent=1 // pred_region
      _
    $region17: #{alignment_detector_forward.1} parent=1 // pred_fallthru
      _
    // Predicated region
    $region18: #{alignment_detector_forward.1} parent=1 // pred_check
      _
    $region19: #{alignment_detector_forward.1} parent=1 // pred_check_branch
      %40 = sbr.rel (0) target = $region21
    $region20: #{alignment_detector_forward.1} parent=1 // pred_region
      %41 = dma.done [#allocation3], 4352
    $region21: #{alignment_detector_forward.1} parent=1 // pred_fallthru
      _
    // Predicated region
    $region22: #{alignment_detector_forward.1} parent=1 // pred_check
      _
    $region23: #{alignment_detector_forward.1} parent=1 // pred_check_branch
      %43 = sbr.rel (0) target = $region25
    $region24: #{alignment_detector_forward.1} parent=1 // pred_region
      %44 = dma.done [#allocation5], 28672
    $region25: #{alignment_detector_forward.1} parent=1 // pred_fallthru
      _
    %v46 = vld [vmem:[%s3] ss:$0 sm:$0xff]
    %s47 = scalar_lea.vmem %s3, 1
    %v48 = vld [vmem:[%s47] ss:$8 sm:$0x3]
    %s49 = scalar_lea.vmem %s3, 2
    %v50 = vld [vmem:[%s49] ss:$8 sm:$0xf]
    %s51 = scalar_lea.vmem %s3, 3
    %v52 = vld [vmem:[%s51] ss:$8 sm:$0xf]
    %v53 = vld [vmem:[%s3 + $0x4] ss:$0 sm:$0xff]
    %v54 = vld [vmem:[%s0] sm:$0xff]
    %v55 = vpack.c.bf16 %v54, %v54
    %v56 = vld [vmem:[#allocation2] sm:$0xf]
    %v57 = vld [vmem:[#allocation2 + $0x4] sm:$0xf]
    %v58 = vld [vmem:[#allocation2 + $0x8] sm:$0xf]
    %v59 = vld [vmem:[#allocation2 + $0xc] sm:$0xf]
    %v64 = vunpack.c.l.b16 %v56
    %v65 = vunpack.c.l.b16 %v57
    %v66 = vunpack.c.l.b16 %v58
    %v67 = vunpack.c.l.b16 %v59
    %v68 = vpack.c.b16 %v65, %v64
    %v69 = vpack.c.b16 %v67, %v66
    %vm72 = vcmask 261120
    %v74 = vsel %vm72, %v55, 0
    %76 = vmatprep.subr.bf16.mxu0 0
    %77 = vmatpush1.bf16.msra.mxu0 %v68
    %78 = vmatprep.subr.bf16.mxu0 0
    %79 = vmatpush1.bf16.msra.mxu0 %v69
    %80 = vmatprep.subr.bf16.mxu0 0
    %81 = vmatpush1.bf16.msra.mxu0 0
    %82 = vmatprep.subr.bf16.mxu0 0
    %83 = vmatpush1.bf16.msra.mxu0 0
    %84 = vmatprep.subr.bf16.mxu0 0
    %85 = vmatpush1.bf16.msra.mxu0 0
    %86 = vmatprep.subr.bf16.mxu0 0
    %87 = vmatpush1.bf16.msra.mxu0 0
    %88 = vmatprep.subr.bf16.mxu0 0
    %89 = vmatpush1.bf16.msra.mxu0 0
    %90 = vmatprep.subr.bf16.mxu0 0
    %91 = vmatpush1.bf16.msra.mxu0 0
    %92 = vmatprep.subr.bf16.mxu0 0
    %93 = vmatpush1.bf16.msra.mxu0 0
    %94 = vmatprep.subr.bf16.mxu0 0
    %95 = vmatpush1.bf16.msra.mxu0 0
    %96 = vmatprep.subr.bf16.mxu0 0
    %97 = vmatpush1.bf16.msra.mxu0 0
    %98 = vmatprep.subr.bf16.mxu0 0
    %99 = vmatpush1.bf16.msra.mxu0 0
    %100 = vmatprep.subr.bf16.mxu0 0
    %101 = vmatpush1.bf16.msra.mxu0 0
    %102 = vmatprep.subr.bf16.mxu0 0
    %103 = vmatpush1.bf16.msra.mxu0 0
    %104 = vmatprep.subr.bf16.mxu0 0
    %105 = vmatpush1.bf16.msra.mxu0 0
    %106 = vmatprep.subr.bf16.mxu0 0
    %107 = vmatpush1.bf16.msra.mxu0 0
    %108 = vmatprep.mubr.bf16.mxu0 0
    %109 = vmatmul.mubr.bf16.gmra.mrb[0].mxu0 %v74
    %v110 = vpop.f32.mrb[0].mxu0
    %v111 = vadd.f32 %v46, %v110
    %v112 = vpop.f32.mrb[0].mxu0
    %v113 = vpop.f32.mrb[0].mxu0
    %v114 = vpop.f32.mrb[0].mxu0
    %115 = vdwg.mxu0
    %v116 = vmax.f32 %v111, 0.0
    %v117 = vpack.c.bf16 %v116, %v116
    %v118 = vld [vmem:[#allocation4] sm:$0xff]
    %v119 = vld [vmem:[#allocation4 + $0x10] sm:$0xff]
    %v120 = vld [vmem:[#allocation4 + $0x20] sm:$0xff]
    %v121 = vld [vmem:[#allocation4 + $0x30] sm:$0xff]
    %v122 = vld [vmem:[#allocation4 + $0x40] sm:$0xff]
    %v123 = vld [vmem:[#allocation4 + $0x50] sm:$0xff]
    %v124 = vld [vmem:[#allocation4 + $0x60] sm:$0xff]
    %v125 = vld [vmem:[#allocation4 + $0x70] sm:$0xff]
    %v126 = vld [vmem:[#allocation4 + $0x80] sm:$0xff]
    %v127 = vld [vmem:[#allocation4 + $0x90] sm:$0xff]
    %v128 = vld [vmem:[#allocation4 + $0xa0] sm:$0xff]
    %v129 = vld [vmem:[#allocation4 + $0xb0] sm:$0xff]
    %v130 = vld [vmem:[#allocation4 + $0xc0] sm:$0xff]
    %v131 = vld [vmem:[#allocation4 + $0xd0] sm:$0xff]
    %v132 = vld [vmem:[#allocation4 + $0xe0] sm:$0xff]
    %v133 = vld [vmem:[#allocation4 + $0xf0] sm:$0xff]
    %v135 = vlaneseq
    %v136 = vshrl.u32 %v135, 7
    %v137 = vsub.s32 0, %v136
    %v138 = vrot.slane %v48, %v137
    %v139 = vlaneseq
    %v140 = vshrl.u32 %v139, 7
    %v141 = vsub.s32 1, %v140
    %v142 = vrot.slane %v48, %v141
    %v161 = vunpack.c.l.b16 %v118
    %v162 = vunpack.c.h.b16 %v118
    %v163 = vunpack.c.l.b16 %v119
    %v164 = vunpack.c.h.b16 %v119
    %v165 = vunpack.c.l.b16 %v120
    %v166 = vunpack.c.h.b16 %v120
    %v167 = vunpack.c.l.b16 %v121
    %v168 = vunpack.c.h.b16 %v121
    %v169 = vunpack.c.l.b16 %v122
    %v170 = vunpack.c.h.b16 %v122
    %v171 = vunpack.c.l.b16 %v123
    %v172 = vunpack.c.h.b16 %v123
    %v173 = vunpack.c.l.b16 %v124
    %v174 = vunpack.c.h.b16 %v124
    %v175 = vunpack.c.l.b16 %v125
    %v176 = vunpack.c.h.b16 %v125
    %v177 = vunpack.c.l.b16 %v126
    %v178 = vunpack.c.h.b16 %v126
    %v179 = vunpack.c.l.b16 %v127
    %v180 = vunpack.c.h.b16 %v127
    %v181 = vunpack.c.l.b16 %v128
    %v182 = vunpack.c.h.b16 %v128
    %v183 = vunpack.c.l.b16 %v129
    %v184 = vunpack.c.h.b16 %v129
    %v185 = vunpack.c.l.b16 %v130
    %v186 = vunpack.c.h.b16 %v130
    %v187 = vunpack.c.l.b16 %v131
    %v188 = vunpack.c.h.b16 %v131
    %v189 = vunpack.c.l.b16 %v132
    %v190 = vunpack.c.h.b16 %v132
    %v191 = vunpack.c.l.b16 %v133
    %v192 = vunpack.c.h.b16 %v133
    %v193 = vpack.c.b16 %v163, %v161
    %v194 = vpack.c.b16 %v164, %v162
    %v195 = vpack.c.b16 %v167, %v165
    %v196 = vpack.c.b16 %v168, %v166
    %v197 = vpack.c.b16 %v171, %v169
    %v198 = vpack.c.b16 %v172, %v170
    %v199 = vpack.c.b16 %v175, %v173
    %v200 = vpack.c.b16 %v176, %v174
    %v201 = vpack.c.b16 %v179, %v177
    %v202 = vpack.c.b16 %v180, %v178
    %v203 = vpack.c.b16 %v183, %v181
    %v204 = vpack.c.b16 %v184, %v182
    %v205 = vpack.c.b16 %v187, %v185
    %v206 = vpack.c.b16 %v188, %v186
    %v207 = vpack.c.b16 %v191, %v189
    %v208 = vpack.c.b16 %v192, %v190
    %225 = vmatprep.subr.bf16.mxu0 %v194
    %226 = vmatpush1.bf16.msra.mxu0 %v193
    %227 = vmatprep.subr.bf16.mxu0 %v196
    %228 = vmatpush1.bf16.msra.mxu0 %v195
    %229 = vmatprep.subr.bf16.mxu0 %v198
    %230 = vmatpush1.bf16.msra.mxu0 %v197
    %231 = vmatprep.subr.bf16.mxu0 %v200
    %232 = vmatpush1.bf16.msra.mxu0 %v199
    %233 = vmatprep.subr.bf16.mxu0 %v202
    %234 = vmatpush1.bf16.msra.mxu0 %v201
    %235 = vmatprep.subr.bf16.mxu0 %v204
    %236 = vmatpush1.bf16.msra.mxu0 %v203
    %237 = vmatprep.subr.bf16.mxu0 %v206
    %238 = vmatpush1.bf16.msra.mxu0 %v205
    %239 = vmatprep.subr.bf16.mxu0 %v208
    %240 = vmatpush1.bf16.msra.mxu0 %v207
    %241 = vmatprep.subr.bf16.mxu0 0
    %242 = vmatpush1.bf16.msra.mxu0 0
    %243 = vmatprep.subr.bf16.mxu0 0
    %244 = vmatpush1.bf16.msra.mxu0 0
    %245 = vmatprep.subr.bf16.mxu0 0
    %246 = vmatpush1.bf16.msra.mxu0 0
    %247 = vmatprep.subr.bf16.mxu0 0
    %248 = vmatpush1.bf16.msra.mxu0 0
    %249 = vmatprep.subr.bf16.mxu0 0
    %250 = vmatpush1.bf16.msra.mxu0 0
    %251 = vmatprep.subr.bf16.mxu0 0
    %252 = vmatpush1.bf16.msra.mxu0 0
    %253 = vmatprep.subr.bf16.mxu0 0
    %254 = vmatpush1.bf16.msra.mxu0 0
    %255 = vmatprep.subr.bf16.mxu0 0
    %256 = vmatpush1.bf16.msra.mxu0 0
    %257 = vmatprep.mubr.bf16.mxu0 0
    %258 = vmatmul.mubr.bf16.gmra.mrb[0].mxu0 %v117
    %v259 = vpop.f32.mrb[0].mxu0
    %v260 = vadd.f32 %v138, %v259
    %v261 = vpop.f32.mrb[0].mxu0
    %v262 = vadd.f32 %v142, %v261
    %v263 = vpop.f32.mrb[0].mxu0
    %v264 = vpop.f32.mrb[0].mxu0
    %265 = vdwg.mxu0
    %v266 = vmax.f32 %v260, 0.0
    %v267 = vmax.f32 %v262, 0.0
    %v268 = vpack.c.bf16 %v266, %v266
    %v269 = vpack.c.bf16 %v267, %v267
    %v270 = vld [vmem:[#allocation4 + $0x100] sm:$0xff]
    %v271 = vld [vmem:[#allocation4 + $0x108] sm:$0xff]
    %v272 = vld [vmem:[#allocation4 + $0x110] sm:$0xff]
    %v273 = vld [vmem:[#allocation4 + $0x118] sm:$0xff]
    %v274 = vld [vmem:[#allocation4 + $0x120] sm:$0xff]
    %v275 = vld [vmem:[#allocation4 + $0x128] sm:$0xff]
    %v276 = vld [vmem:[#allocation4 + $0x130] sm:$0xff]
    %v277 = vld [vmem:[#allocation4 + $0x138] sm:$0xff]
    %v278 = vld [vmem:[#allocation4 + $0x140] sm:$0xff]
    %v279 = vld [vmem:[#allocation4 + $0x148] sm:$0xff]
    %v280 = vld [vmem:[#allocation4 + $0x150] sm:$0xff]
    %v281 = vld [vmem:[#allocation4 + $0x158] sm:$0xff]
    %v282 = vld [vmem:[#allocation4 + $0x160] sm:$0xff]
    %v283 = vld [vmem:[#allocation4 + $0x168] sm:$0xff]
    %v284 = vld [vmem:[#allocation4 + $0x170] sm:$0xff]
    %v285 = vld [vmem:[#allocation4 + $0x178] sm:$0xff]
    %v286 = vld [vmem:[#allocation4 + $0x180] sm:$0xff]
    %v287 = vld [vmem:[#allocation4 + $0x188] sm:$0xff]
    %v288 = vld [vmem:[#allocation4 + $0x190] sm:$0xff]
    %v289 = vld [vmem:[#allocation4 + $0x198] sm:$0xff]
    %v290 = vld [vmem:[#allocation4 + $0x1a0] sm:$0xff]
    %v291 = vld [vmem:[#allocation4 + $0x1a8] sm:$0xff]
    %v292 = vld [vmem:[#allocation4 + $0x1b0] sm:$0xff]
    %v293 = vld [vmem:[#allocation4 + $0x1b8] sm:$0xff]
    %v294 = vld [vmem:[#allocation4 + $0x1c0] sm:$0xff]
    %v295 = vld [vmem:[#allocation4 + $0x1c8] sm:$0xff]
    %v296 = vld [vmem:[#allocation4 + $0x1d0] sm:$0xff]
    %v297 = vld [vmem:[#allocation4 + $0x1d8] sm:$0xff]
    %v298 = vld [vmem:[#allocation4 + $0x1e0] sm:$0xff]
    %v299 = vld [vmem:[#allocation4 + $0x1e8] sm:$0xff]
    %v300 = vld [vmem:[#allocation4 + $0x1f0] sm:$0xff]
    %v301 = vld [vmem:[#allocation4 + $0x1f8] sm:$0xff]
    %v302 = vld [vmem:[#allocation4 + $0x200] sm:$0xff]
    %v303 = vld [vmem:[#allocation4 + $0x208] sm:$0xff]
    %v304 = vld [vmem:[#allocation4 + $0x210] sm:$0xff]
    %v305 = vld [vmem:[#allocation4 + $0x218] sm:$0xff]
    %v306 = vld [vmem:[#allocation4 + $0x220] sm:$0xff]
    %v307 = vld [vmem:[#allocation4 + $0x228] sm:$0xff]
    %v308 = vld [vmem:[#allocation4 + $0x230] sm:$0xff]
    %v309 = vld [vmem:[#allocation4 + $0x238] sm:$0xff]
    %v310 = vld [vmem:[#allocation4 + $0x240] sm:$0xff]
    %v311 = vld [vmem:[#allocation4 + $0x248] sm:$0xff]
    %v312 = vld [vmem:[#allocation4 + $0x250] sm:$0xff]
    %v313 = vld [vmem:[#allocation4 + $0x258] sm:$0xff]
    %v314 = vld [vmem:[#allocation4 + $0x260] sm:$0xff]
    %v315 = vld [vmem:[#allocation4 + $0x268] sm:$0xff]
    %v316 = vld [vmem:[#allocation4 + $0x270] sm:$0xff]
    %v317 = vld [vmem:[#allocation4 + $0x278] sm:$0xff]
    %v318 = vld [vmem:[#allocation4 + $0x280] sm:$0xff]
    %v319 = vld [vmem:[#allocation4 + $0x288] sm:$0xff]
    %v320 = vld [vmem:[#allocation4 + $0x290] sm:$0xff]
    %v321 = vld [vmem:[#allocation4 + $0x298] sm:$0xff]
    %v322 = vld [vmem:[#allocation4 + $0x2a0] sm:$0xff]
    %v323 = vld [vmem:[#allocation4 + $0x2a8] sm:$0xff]
    %v324 = vld [vmem:[#allocation4 + $0x2b0] sm:$0xff]
    %v325 = vld [vmem:[#allocation4 + $0x2b8] sm:$0xff]
    %v326 = vld [vmem:[#allocation4 + $0x2c0] sm:$0xff]
    %v327 = vld [vmem:[#allocation4 + $0x2c8] sm:$0xff]
    %v328 = vld [vmem:[#allocation4 + $0x2d0] sm:$0xff]
    %v329 = vld [vmem:[#allocation4 + $0x2d8] sm:$0xff]
    %v330 = vld [vmem:[#allocation4 + $0x2e0] sm:$0xff]
    %v331 = vld [vmem:[#allocation4 + $0x2e8] sm:$0xff]
    %v332 = vld [vmem:[#allocation4 + $0x2f0] sm:$0xff]
    %v333 = vld [vmem:[#allocation4 + $0x2f8] sm:$0xff]
    %v335 = vlaneseq
    %v336 = vshrl.u32 %v335, 7
    %v337 = vsub.s32 0, %v336
    %v338 = vrot.slane %v50, %v337
    %v339 = vlaneseq
    %v340 = vshrl.u32 %v339, 7
    %v341 = vsub.s32 1, %v340
    %v342 = vrot.slane %v50, %v341
    %v343 = vlaneseq
    %v344 = vshrl.u32 %v343, 7
    %v345 = vsub.s32 2, %v344
    %v346 = vrot.slane %v50, %v345
    %v347 = vlaneseq
    %v348 = vshrl.u32 %v347, 7
    %v349 = vsub.s32 3, %v348
    %v350 = vrot.slane %v50, %v349
    %v419 = vunpack.c.l.b16 %v270
    %v420 = vunpack.c.h.b16 %v270
    %v421 = vunpack.c.l.b16 %v271
    %v422 = vunpack.c.h.b16 %v271
    %v423 = vunpack.c.l.b16 %v272
    %v424 = vunpack.c.h.b16 %v272
    %v425 = vunpack.c.l.b16 %v273
    %v426 = vunpack.c.h.b16 %v273
    %v427 = vunpack.c.l.b16 %v274
    %v428 = vunpack.c.h.b16 %v274
    %v429 = vunpack.c.l.b16 %v275
    %v430 = vunpack.c.h.b16 %v275
    %v431 = vunpack.c.l.b16 %v276
    %v432 = vunpack.c.h.b16 %v276
    %v433 = vunpack.c.l.b16 %v277
    %v434 = vunpack.c.h.b16 %v277
    %v435 = vunpack.c.l.b16 %v278
    %v436 = vunpack.c.h.b16 %v278
    %v437 = vunpack.c.l.b16 %v279
    %v438 = vunpack.c.h.b16 %v279
    %v439 = vunpack.c.l.b16 %v280
    %v440 = vunpack.c.h.b16 %v280
    %v441 = vunpack.c.l.b16 %v281
    %v442 = vunpack.c.h.b16 %v281
    %v443 = vunpack.c.l.b16 %v282
    %v444 = vunpack.c.h.b16 %v282
    %v445 = vunpack.c.l.b16 %v283
    %v446 = vunpack.c.h.b16 %v283
    %v447 = vunpack.c.l.b16 %v284
    %v448 = vunpack.c.h.b16 %v284
    %v449 = vunpack.c.l.b16 %v285
    %v450 = vunpack.c.h.b16 %v285
    %v451 = vunpack.c.l.b16 %v286
    %v452 = vunpack.c.h.b16 %v286
    %v453 = vunpack.c.l.b16 %v287
    %v454 = vunpack.c.h.b16 %v287
    %v455 = vunpack.c.l.b16 %v288
    %v456 = vunpack.c.h.b16 %v288
    %v457 = vunpack.c.l.b16 %v289
    %v458 = vunpack.c.h.b16 %v289
    %v459 = vunpack.c.l.b16 %v290
    %v460 = vunpack.c.h.b16 %v290
    %v461 = vunpack.c.l.b16 %v291
    %v462 = vunpack.c.h.b16 %v291
    %v463 = vunpack.c.l.b16 %v292
    %v464 = vunpack.c.h.b16 %v292
    %v465 = vunpack.c.l.b16 %v293
    %v466 = vunpack.c.h.b16 %v293
    %v467 = vunpack.c.l.b16 %v294
    %v468 = vunpack.c.h.b16 %v294
    %v469 = vunpack.c.l.b16 %v295
    %v470 = vunpack.c.h.b16 %v295
    %v471 = vunpack.c.l.b16 %v296
    %v472 = vunpack.c.h.b16 %v296
    %v473 = vunpack.c.l.b16 %v297
    %v474 = vunpack.c.h.b16 %v297
    %v475 = vunpack.c.l.b16 %v298
    %v476 = vunpack.c.h.b16 %v298
    %v477 = vunpack.c.l.b16 %v299
    %v478 = vunpack.c.h.b16 %v299
    %v479 = vunpack.c.l.b16 %v300
    %v480 = vunpack.c.h.b16 %v300
    %v481 = vunpack.c.l.b16 %v301
    %v482 = vunpack.c.h.b16 %v301
    %v483 = vunpack.c.l.b16 %v302
    %v484 = vunpack.c.h.b16 %v302
    %v485 = vunpack.c.l.b16 %v303
    %v486 = vunpack.c.h.b16 %v303
    %v487 = vunpack.c.l.b16 %v304
    %v488 = vunpack.c.h.b16 %v304
    %v489 = vunpack.c.l.b16 %v305
    %v490 = vunpack.c.h.b16 %v305
    %v491 = vunpack.c.l.b16 %v306
    %v492 = vunpack.c.h.b16 %v306
    %v493 = vunpack.c.l.b16 %v307
    %v494 = vunpack.c.h.b16 %v307
    %v495 = vunpack.c.l.b16 %v308
    %v496 = vunpack.c.h.b16 %v308
    %v497 = vunpack.c.l.b16 %v309
    %v498 = vunpack.c.h.b16 %v309
    %v499 = vunpack.c.l.b16 %v310
    %v500 = vunpack.c.h.b16 %v310
    %v501 = vunpack.c.l.b16 %v311
    %v502 = vunpack.c.h.b16 %v311
    %v503 = vunpack.c.l.b16 %v312
    %v504 = vunpack.c.h.b16 %v312
    %v505 = vunpack.c.l.b16 %v313
    %v506 = vunpack.c.h.b16 %v313
    %v507 = vunpack.c.l.b16 %v314
    %v508 = vunpack.c.h.b16 %v314
    %v509 = vunpack.c.l.b16 %v315
    %v510 = vunpack.c.h.b16 %v315
    %v511 = vunpack.c.l.b16 %v316
    %v512 = vunpack.c.h.b16 %v316
    %v513 = vunpack.c.l.b16 %v317
    %v514 = vunpack.c.h.b16 %v317
    %v515 = vunpack.c.l.b16 %v318
    %v516 = vunpack.c.h.b16 %v318
    %v517 = vunpack.c.l.b16 %v319
    %v518 = vunpack.c.h.b16 %v319
    %v519 = vunpack.c.l.b16 %v320
    %v520 = vunpack.c.h.b16 %v320
    %v521 = vunpack.c.l.b16 %v321
    %v522 = vunpack.c.h.b16 %v321
    %v523 = vunpack.c.l.b16 %v322
    %v524 = vunpack.c.h.b16 %v322
    %v525 = vunpack.c.l.b16 %v323
    %v526 = vunpack.c.h.b16 %v323
    %v527 = vunpack.c.l.b16 %v324
    %v528 = vunpack.c.h.b16 %v324
    %v529 = vunpack.c.l.b16 %v325
    %v530 = vunpack.c.h.b16 %v325
    %v531 = vunpack.c.l.b16 %v326
    %v532 = vunpack.c.h.b16 %v326
    %v533 = vunpack.c.l.b16 %v327
    %v534 = vunpack.c.h.b16 %v327
    %v535 = vunpack.c.l.b16 %v328
    %v536 = vunpack.c.h.b16 %v328
    %v537 = vunpack.c.l.b16 %v329
    %v538 = vunpack.c.h.b16 %v329
    %v539 = vunpack.c.l.b16 %v330
    %v540 = vunpack.c.h.b16 %v330
    %v541 = vunpack.c.l.b16 %v331
    %v542 = vunpack.c.h.b16 %v331
    %v543 = vunpack.c.l.b16 %v332
    %v544 = vunpack.c.h.b16 %v332
    %v545 = vunpack.c.l.b16 %v333
    %v546 = vunpack.c.h.b16 %v333
    %v547 = vpack.c.b16 %v423, %v419
    %v548 = vpack.c.b16 %v424, %v420
    %v549 = vpack.c.b16 %v425, %v421
    %v550 = vpack.c.b16 %v426, %v422
    %v551 = vpack.c.b16 %v431, %v427
    %v552 = vpack.c.b16 %v432, %v428
    %v553 = vpack.c.b16 %v433, %v429
    %v554 = vpack.c.b16 %v434, %v430
    %v555 = vpack.c.b16 %v439, %v435
    %v556 = vpack.c.b16 %v440, %v436
    %v557 = vpack.c.b16 %v441, %v437
    %v558 = vpack.c.b16 %v442, %v438
    %v559 = vpack.c.b16 %v447, %v443
    %v560 = vpack.c.b16 %v448, %v444
    %v561 = vpack.c.b16 %v449, %v445
    %v562 = vpack.c.b16 %v450, %v446
    %v563 = vpack.c.b16 %v455, %v451
    %v564 = vpack.c.b16 %v456, %v452
    %v565 = vpack.c.b16 %v457, %v453
    %v566 = vpack.c.b16 %v458, %v454
    %v567 = vpack.c.b16 %v463, %v459
    %v568 = vpack.c.b16 %v464, %v460
    %v569 = vpack.c.b16 %v465, %v461
    %v570 = vpack.c.b16 %v466, %v462
    %v571 = vpack.c.b16 %v471, %v467
    %v572 = vpack.c.b16 %v472, %v468
    %v573 = vpack.c.b16 %v473, %v469
    %v574 = vpack.c.b16 %v474, %v470
    %v575 = vpack.c.b16 %v479, %v475
    %v576 = vpack.c.b16 %v480, %v476
    %v577 = vpack.c.b16 %v481, %v477
    %v578 = vpack.c.b16 %v482, %v478
    %v579 = vpack.c.b16 %v487, %v483
    %v580 = vpack.c.b16 %v488, %v484
    %v581 = vpack.c.b16 %v489, %v485
    %v582 = vpack.c.b16 %v490, %v486
    %v583 = vpack.c.b16 %v495, %v491
    %v584 = vpack.c.b16 %v496, %v492
    %v585 = vpack.c.b16 %v497, %v493
    %v586 = vpack.c.b16 %v498, %v494
    %v587 = vpack.c.b16 %v503, %v499
    %v588 = vpack.c.b16 %v504, %v500
    %v589 = vpack.c.b16 %v505, %v501
    %v590 = vpack.c.b16 %v506, %v502
    %v591 = vpack.c.b16 %v511, %v507
    %v592 = vpack.c.b16 %v512, %v508
    %v593 = vpack.c.b16 %v513, %v509
    %v594 = vpack.c.b16 %v514, %v510
    %v595 = vpack.c.b16 %v519, %v515
    %v596 = vpack.c.b16 %v520, %v516
    %v597 = vpack.c.b16 %v521, %v517
    %v598 = vpack.c.b16 %v522, %v518
    %v599 = vpack.c.b16 %v527, %v523
    %v600 = vpack.c.b16 %v528, %v524
    %v601 = vpack.c.b16 %v529, %v525
    %v602 = vpack.c.b16 %v530, %v526
    %v603 = vpack.c.b16 %v535, %v531
    %v604 = vpack.c.b16 %v536, %v532
    %v605 = vpack.c.b16 %v537, %v533
    %v606 = vpack.c.b16 %v538, %v534
    %v607 = vpack.c.b16 %v543, %v539
    %v608 = vpack.c.b16 %v544, %v540
    %v609 = vpack.c.b16 %v545, %v541
    %v610 = vpack.c.b16 %v546, %v542
    %675 = vmatprep.subr.bf16.mxu0 %v548
    %676 = vmatpush1.bf16.msra.mxu0 %v547
    %677 = vmatprep.subr.bf16.mxu0 %v552
    %678 = vmatpush1.bf16.msra.mxu0 %v551
    %679 = vmatprep.subr.bf16.mxu0 %v556
    %680 = vmatpush1.bf16.msra.mxu0 %v555
    %681 = vmatprep.subr.bf16.mxu0 %v560
    %682 = vmatpush1.bf16.msra.mxu0 %v559
    %683 = vmatprep.subr.bf16.mxu0 %v564
    %684 = vmatpush1.bf16.msra.mxu0 %v563
    %685 = vmatprep.subr.bf16.mxu0 %v568
    %686 = vmatpush1.bf16.msra.mxu0 %v567
    %687 = vmatprep.subr.bf16.mxu0 %v572
    %688 = vmatpush1.bf16.msra.mxu0 %v571
    %689 = vmatprep.subr.bf16.mxu0 %v576
    %690 = vmatpush1.bf16.msra.mxu0 %v575
    %691 = vmatprep.subr.bf16.mxu0 %v580
    %692 = vmatpush1.bf16.msra.mxu0 %v579
    %693 = vmatprep.subr.bf16.mxu0 %v584
    %694 = vmatpush1.bf16.msra.mxu0 %v583
    %695 = vmatprep.subr.bf16.mxu0 %v588
    %696 = vmatpush1.bf16.msra.mxu0 %v587
    %697 = vmatprep.subr.bf16.mxu0 %v592
    %698 = vmatpush1.bf16.msra.mxu0 %v591
    %699 = vmatprep.subr.bf16.mxu0 %v596
    %700 = vmatpush1.bf16.msra.mxu0 %v595
    %701 = vmatprep.subr.bf16.mxu0 %v600
    %702 = vmatpush1.bf16.msra.mxu0 %v599
    %703 = vmatprep.subr.bf16.mxu0 %v604
    %704 = vmatpush1.bf16.msra.mxu0 %v603
    %705 = vmatprep.subr.bf16.mxu0 %v608
    %706 = vmatpush1.bf16.msra.mxu0 %v607
    %707 = vmatprep.mubr.bf16.mxu0 %v269
    %708 = vmatmul.mubr.bf16.gmra.mrb[0].mxu0 %v268
    %v709 = vpop.f32.mrb[0].mxu0
    %v710 = vadd.f32 %v338, %v709
    %v711 = vpop.f32.mrb[0].mxu0
    %v712 = vadd.f32 %v342, %v711
    %v713 = vpop.f32.mrb[0].mxu0
    %v714 = vpop.f32.mrb[0].mxu0
    %715 = vdwg.mxu0
    %716 = vmatprep.subr.bf16.mxu0 %v550
    %717 = vmatpush1.bf16.msra.mxu0 %v549
    %718 = vmatprep.subr.bf16.mxu0 %v554
    %719 = vmatpush1.bf16.msra.mxu0 %v553
    %720 = vmatprep.subr.bf16.mxu0 %v558
    %721 = vmatpush1.bf16.msra.mxu0 %v557
    %722 = vmatprep.subr.bf16.mxu0 %v562
    %723 = vmatpush1.bf16.msra.mxu0 %v561
    %724 = vmatprep.subr.bf16.mxu0 %v566
    %725 = vmatpush1.bf16.msra.mxu0 %v565
    %726 = vmatprep.subr.bf16.mxu0 %v570
    %727 = vmatpush1.bf16.msra.mxu0 %v569
    %728 = vmatprep.subr.bf16.mxu0 %v574
    %729 = vmatpush1.bf16.msra.mxu0 %v573
    %730 = vmatprep.subr.bf16.mxu0 %v578
    %731 = vmatpush1.bf16.msra.mxu0 %v577
    %732 = vmatprep.subr.bf16.mxu0 %v582
    %733 = vmatpush1.bf16.msra.mxu0 %v581
    %734 = vmatprep.subr.bf16.mxu0 %v586
    %735 = vmatpush1.bf16.msra.mxu0 %v585
    %736 = vmatprep.subr.bf16.mxu0 %v590
    %737 = vmatpush1.bf16.msra.mxu0 %v589
    %738 = vmatprep.subr.bf16.mxu0 %v594
    %739 = vmatpush1.bf16.msra.mxu0 %v593
    %740 = vmatprep.subr.bf16.mxu0 %v598
    %741 = vmatpush1.bf16.msra.mxu0 %v597
    %742 = vmatprep.subr.bf16.mxu0 %v602
    %743 = vmatpush1.bf16.msra.mxu0 %v601
    %744 = vmatprep.subr.bf16.mxu0 %v606
    %745 = vmatpush1.bf16.msra.mxu0 %v605
    %746 = vmatprep.subr.bf16.mxu0 %v610
    %747 = vmatpush1.bf16.msra.mxu0 %v609
    %748 = vmatprep.mubr.bf16.mxu0 %v269
    %749 = vmatmul.mubr.bf16.gmra.mrb[0].mxu0 %v268
    %v750 = vpop.f32.mrb[0].mxu0
    %v751 = vadd.f32 %v346, %v750
    %v752 = vpop.f32.mrb[0].mxu0
    %v753 = vadd.f32 %v350, %v752
    %v754 = vpop.f32.mrb[0].mxu0
    %v755 = vpop.f32.mrb[0].mxu0
    %756 = vdwg.mxu0
    %v757 = vmax.f32 %v710, 0.0
    %v758 = vmax.f32 %v712, 0.0
    %v759 = vmax.f32 %v751, 0.0
    %v760 = vmax.f32 %v753, 0.0
    %v761 = vpack.c.bf16 %v757, %v757
    %v762 = vpack.c.bf16 %v758, %v758
    %v763 = vpack.c.bf16 %v759, %v759
    %v764 = vpack.c.bf16 %v760, %v760
    %v765 = vld [vmem:[#allocation4 + $0x300] sm:$0xff]
    %v766 = vld [vmem:[#allocation4 + $0x308] sm:$0xff]
    %v767 = vld [vmem:[#allocation4 + $0x310] sm:$0xff]
    %v768 = vld [vmem:[#allocation4 + $0x318] sm:$0xff]
    %v769 = vld [vmem:[#allocation4 + $0x320] sm:$0xff]
    %v770 = vld [vmem:[#allocation4 + $0x328] sm:$0xff]
    %v771 = vld [vmem:[#allocation4 + $0x330] sm:$0xff]
    %v772 = vld [vmem:[#allocation4 + $0x338] sm:$0xff]
    %v773 = vld [vmem:[#allocation4 + $0x340] sm:$0xff]
    %v774 = vld [vmem:[#allocation4 + $0x348] sm:$0xff]
    %v775 = vld [vmem:[#allocation4 + $0x350] sm:$0xff]
    %v776 = vld [vmem:[#allocation4 + $0x358] sm:$0xff]
    %v777 = vld [vmem:[#allocation4 + $0x360] sm:$0xff]
    %v778 = vld [vmem:[#allocation4 + $0x368] sm:$0xff]
    %v779 = vld [vmem:[#allocation4 + $0x370] sm:$0xff]
    %v780 = vld [vmem:[#allocation4 + $0x378] sm:$0xff]
    %v781 = vld [vmem:[#allocation4 + $0x380] sm:$0xff]
    %v782 = vld [vmem:[#allocation4 + $0x388] sm:$0xff]
    %v783 = vld [vmem:[#allocation4 + $0x390] sm:$0xff]
    %v784 = vld [vmem:[#allocation4 + $0x398] sm:$0xff]
    %v785 = vld [vmem:[#allocation4 + $0x3a0] sm:$0xff]
    %v786 = vld [vmem:[#allocation4 + $0x3a8] sm:$0xff]
    %v787 = vld [vmem:[#allocation4 + $0x3b0] sm:$0xff]
    %v788 = vld [vmem:[#allocation4 + $0x3b8] sm:$0xff]
    %v789 = vld [vmem:[#allocation4 + $0x3c0] sm:$0xff]
    %v790 = vld [vmem:[#allocation4 + $0x3c8] sm:$0xff]
    %v791 = vld [vmem:[#allocation4 + $0x3d0] sm:$0xff]
    %v792 = vld [vmem:[#allocation4 + $0x3d8] sm:$0xff]
    %v793 = vld [vmem:[#allocation4 + $0x3e0] sm:$0xff]
    %v794 = vld [vmem:[#allocation4 + $0x3e8] sm:$0xff]
    %v795 = vld [vmem:[#allocation4 + $0x3f0] sm:$0xff]
    %v796 = vld [vmem:[#allocation4 + $0x3f8] sm:$0xff]
    %v797 = vld [vmem:[#allocation4 + $0x400] sm:$0xff]
    %v798 = vld [vmem:[#allocation4 + $0x408] sm:$0xff]
    %v799 = vld [vmem:[#allocation4 + $0x410] sm:$0xff]
    %v800 = vld [vmem:[#allocation4 + $0x418] sm:$0xff]
    %v801 = vld [vmem:[#allocation4 + $0x420] sm:$0xff]
    %v802 = vld [vmem:[#allocation4 + $0x428] sm:$0xff]
    %v803 = vld [vmem:[#allocation4 + $0x430] sm:$0xff]
    %v804 = vld [vmem:[#allocation4 + $0x438] sm:$0xff]
    %v805 = vld [vmem:[#allocation4 + $0x440] sm:$0xff]
    %v806 = vld [vmem:[#allocation4 + $0x448] sm:$0xff]
    %v807 = vld [vmem:[#allocation4 + $0x450] sm:$0xff]
    %v808 = vld [vmem:[#allocation4 + $0x458] sm:$0xff]
    %v809 = vld [vmem:[#allocation4 + $0x460] sm:$0xff]
    %v810 = vld [vmem:[#allocation4 + $0x468] sm:$0xff]
    %v811 = vld [vmem:[#allocation4 + $0x470] sm:$0xff]
    %v812 = vld [vmem:[#allocation4 + $0x478] sm:$0xff]
    %v813 = vld [vmem:[#allocation4 + $0x480] sm:$0xff]
    %v814 = vld [vmem:[#allocation4 + $0x488] sm:$0xff]
    %v815 = vld [vmem:[#allocation4 + $0x490] sm:$0xff]
    %v816 = vld [vmem:[#allocation4 + $0x498] sm:$0xff]
    %v817 = vld [vmem:[#allocation4 + $0x4a0] sm:$0xff]
    %v818 = vld [vmem:[#allocation4 + $0x4a8] sm:$0xff]
    %v819 = vld [vmem:[#allocation4 + $0x4b0] sm:$0xff]
    %v820 = vld [vmem:[#allocation4 + $0x4b8] sm:$0xff]
    %v821 = vld [vmem:[#allocation4 + $0x4c0] sm:$0xff]
    %v822 = vld [vmem:[#allocation4 + $0x4c8] sm:$0xff]
    %v823 = vld [vmem:[#allocation4 + $0x4d0] sm:$0xff]
    %v824 = vld [vmem:[#allocation4 + $0x4d8] sm:$0xff]
    %v825 = vld [vmem:[#allocation4 + $0x4e0] sm:$0xff]
    %v826 = vld [vmem:[#allocation4 + $0x4e8] sm:$0xff]
    %v827 = vld [vmem:[#allocation4 + $0x4f0] sm:$0xff]
    %v828 = vld [vmem:[#allocation4 + $0x4f8] sm:$0xff]
    %v829 = vld [vmem:[#allocation4 + $0x500] sm:$0xff]
    %v830 = vld [vmem:[#allocation4 + $0x508] sm:$0xff]
    %v831 = vld [vmem:[#allocation4 + $0x510] sm:$0xff]
    %v832 = vld [vmem:[#allocation4 + $0x518] sm:$0xff]
    %v833 = vld [vmem:[#allocation4 + $0x520] sm:$0xff]
    %v834 = vld [vmem:[#allocation4 + $0x528] sm:$0xff]
    %v835 = vld [vmem:[#allocation4 + $0x530] sm:$0xff]
    %v836 = vld [vmem:[#allocation4 + $0x538] sm:$0xff]
    %v837 = vld [vmem:[#allocation4 + $0x540] sm:$0xff]
    %v838 = vld [vmem:[#allocation4 + $0x548] sm:$0xff]
    %v839 = vld [vmem:[#allocation4 + $0x550] sm:$0xff]
    %v840 = vld [vmem:[#allocation4 + $0x558] sm:$0xff]
    %v841 = vld [vmem:[#allocation4 + $0x560] sm:$0xff]
    %v842 = vld [vmem:[#allocation4 + $0x568] sm:$0xff]
    %v843 = vld [vmem:[#allocation4 + $0x570] sm:$0xff]
    %v844 = vld [vmem:[#allocation4 + $0x578] sm:$0xff]
    %v845 = vld [vmem:[#allocation4 + $0x580] sm:$0xff]
    %v846 = vld [vmem:[#allocation4 + $0x588] sm:$0xff]
    %v847 = vld [vmem:[#allocation4 + $0x590] sm:$0xff]
    %v848 = vld [vmem:[#allocation4 + $0x598] sm:$0xff]
    %v849 = vld [vmem:[#allocation4 + $0x5a0] sm:$0xff]
    %v850 = vld [vmem:[#allocation4 + $0x5a8] sm:$0xff]
    %v851 = vld [vmem:[#allocation4 + $0x5b0] sm:$0xff]
    %v852 = vld [vmem:[#allocation4 + $0x5b8] sm:$0xff]
    %v853 = vld [vmem:[#allocation4 + $0x5c0] sm:$0xff]
    %v854 = vld [vmem:[#allocation4 + $0x5c8] sm:$0xff]
    %v855 = vld [vmem:[#allocation4 + $0x5d0] sm:$0xff]
    %v856 = vld [vmem:[#allocation4 + $0x5d8] sm:$0xff]
    %v857 = vld [vmem:[#allocation4 + $0x5e0] sm:$0xff]
    %v858 = vld [vmem:[#allocation4 + $0x5e8] sm:$0xff]
    %v859 = vld [vmem:[#allocation4 + $0x5f0] sm:$0xff]
    %v860 = vld [vmem:[#allocation4 + $0x5f8] sm:$0xff]
    %v861 = vld [vmem:[#allocation4 + $0x600] sm:$0xff]
    %v862 = vld [vmem:[#allocation4 + $0x608] sm:$0xff]
    %v863 = vld [vmem:[#allocation4 + $0x610] sm:$0xff]
    %v864 = vld [vmem:[#allocation4 + $0x618] sm:$0xff]
    %v865 = vld [vmem:[#allocation4 + $0x620] sm:$0xff]
    %v866 = vld [vmem:[#allocation4 + $0x628] sm:$0xff]
    %v867 = vld [vmem:[#allocation4 + $0x630] sm:$0xff]
    %v868 = vld [vmem:[#allocation4 + $0x638] sm:$0xff]
    %v869 = vld [vmem:[#allocation4 + $0x640] sm:$0xff]
    %v870 = vld [vmem:[#allocation4 + $0x648] sm:$0xff]
    %v871 = vld [vmem:[#allocation4 + $0x650] sm:$0xff]
    %v872 = vld [vmem:[#allocation4 + $0x658] sm:$0xff]
    %v873 = vld [vmem:[#allocation4 + $0x660] sm:$0xff]
    %v874 = vld [vmem:[#allocation4 + $0x668] sm:$0xff]
    %v875 = vld [vmem:[#allocation4 + $0x670] sm:$0xff]
    %v876 = vld [vmem:[#allocation4 + $0x678] sm:$0xff]
    %v877 = vld [vmem:[#allocation4 + $0x680] sm:$0xff]
    %v878 = vld [vmem:[#allocation4 + $0x688] sm:$0xff]
    %v879 = vld [vmem:[#allocation4 + $0x690] sm:$0xff]
    %v880 = vld [vmem:[#allocation4 + $0x698] sm:$0xff]
    %v881 = vld [vmem:[#allocation4 + $0x6a0] sm:$0xff]
    %v882 = vld [vmem:[#allocation4 + $0x6a8] sm:$0xff]
    %v883 = vld [vmem:[#allocation4 + $0x6b0] sm:$0xff]
    %v884 = vld [vmem:[#allocation4 + $0x6b8] sm:$0xff]
    %v885 = vld [vmem:[#allocation4 + $0x6c0] sm:$0xff]
    %v886 = vld [vmem:[#allocation4 + $0x6c8] sm:$0xff]
    %v887 = vld [vmem:[#allocation4 + $0x6d0] sm:$0xff]
    %v888 = vld [vmem:[#allocation4 + $0x6d8] sm:$0xff]
    %v889 = vld [vmem:[#allocation4 + $0x6e0] sm:$0xff]
    %v890 = vld [vmem:[#allocation4 + $0x6e8] sm:$0xff]
    %v891 = vld [vmem:[#allocation4 + $0x6f0] sm:$0xff]
    %v892 = vld [vmem:[#allocation4 + $0x6f8] sm:$0xff]
    %v894 = vlaneseq
    %v895 = vshrl.u32 %v894, 7
    %v896 = vsub.s32 0, %v895
    %v897 = vrot.slane %v52, %v896
    %v898 = vlaneseq
    %v899 = vshrl.u32 %v898, 7
    %v900 = vsub.s32 1, %v899
    %v901 = vrot.slane %v52, %v900
    %v902 = vlaneseq
    %v903 = vshrl.u32 %v902, 7
    %v904 = vsub.s32 2, %v903
    %v905 = vrot.slane %v52, %v904
    %v906 = vlaneseq
    %v907 = vshrl.u32 %v906, 7
    %v908 = vsub.s32 3, %v907
    %v909 = vrot.slane %v52, %v908
    %v1042 = vunpack.c.l.b16 %v765
    %v1043 = vunpack.c.h.b16 %v765
    %v1044 = vunpack.c.l.b16 %v766
    %v1045 = vunpack.c.h.b16 %v766
    %v1046 = vunpack.c.l.b16 %v767
    %v1047 = vunpack.c.h.b16 %v767
    %v1048 = vunpack.c.l.b16 %v768
    %v1049 = vunpack.c.h.b16 %v768
    %v1050 = vunpack.c.l.b16 %v769
    %v1051 = vunpack.c.h.b16 %v769
    %v1052 = vunpack.c.l.b16 %v770
    %v1053 = vunpack.c.h.b16 %v770
    %v1054 = vunpack.c.l.b16 %v771
    %v1055 = vunpack.c.h.b16 %v771
    %v1056 = vunpack.c.l.b16 %v772
    %v1057 = vunpack.c.h.b16 %v772
    %v1058 = vunpack.c.l.b16 %v773
    %v1059 = vunpack.c.h.b16 %v773
    %v1060 = vunpack.c.l.b16 %v774
    %v1061 = vunpack.c.h.b16 %v774
    %v1062 = vunpack.c.l.b16 %v775
    %v1063 = vunpack.c.h.b16 %v775
    %v1064 = vunpack.c.l.b16 %v776
    %v1065 = vunpack.c.h.b16 %v776
    %v1066 = vunpack.c.l.b16 %v777
    %v1067 = vunpack.c.h.b16 %v777
    %v1068 = vunpack.c.l.b16 %v778
    %v1069 = vunpack.c.h.b16 %v778
    %v1070 = vunpack.c.l.b16 %v779
    %v1071 = vunpack.c.h.b16 %v779
    %v1072 = vunpack.c.l.b16 %v780
    %v1073 = vunpack.c.h.b16 %v780
    %v1074 = vunpack.c.l.b16 %v781
    %v1075 = vunpack.c.h.b16 %v781
    %v1076 = vunpack.c.l.b16 %v782
    %v1077 = vunpack.c.h.b16 %v782
    %v1078 = vunpack.c.l.b16 %v783
    %v1079 = vunpack.c.h.b16 %v783
    %v1080 = vunpack.c.l.b16 %v784
    %v1081 = vunpack.c.h.b16 %v784
    %v1082 = vunpack.c.l.b16 %v785
    %v1083 = vunpack.c.h.b16 %v785
    %v1084 = vunpack.c.l.b16 %v786
    %v1085 = vunpack.c.h.b16 %v786
    %v1086 = vunpack.c.l.b16 %v787
    %v1087 = vunpack.c.h.b16 %v787
    %v1088 = vunpack.c.l.b16 %v788
    %v1089 = vunpack.c.h.b16 %v788
    %v1090 = vunpack.c.l.b16 %v789
    %v1091 = vunpack.c.h.b16 %v789
    %v1092 = vunpack.c.l.b16 %v790
    %v1093 = vunpack.c.h.b16 %v790
    %v1094 = vunpack.c.l.b16 %v791
    %v1095 = vunpack.c.h.b16 %v791
    %v1096 = vunpack.c.l.b16 %v792
    %v1097 = vunpack.c.h.b16 %v792
    %v1098 = vunpack.c.l.b16 %v793
    %v1099 = vunpack.c.h.b16 %v793
    %v1100 = vunpack.c.l.b16 %v794
    %v1101 = vunpack.c.h.b16 %v794
    %v1102 = vunpack.c.l.b16 %v795
    %v1103 = vunpack.c.h.b16 %v795
    %v1104 = vunpack.c.l.b16 %v796
    %v1105 = vunpack.c.h.b16 %v796
    %v1106 = vunpack.c.l.b16 %v797
    %v1107 = vunpack.c.h.b16 %v797
    %v1108 = vunpack.c.l.b16 %v798
    %v1109 = vunpack.c.h.b16 %v798
    %v1110 = vunpack.c.l.b16 %v799
    %v1111 = vunpack.c.h.b16 %v799
    %v1112 = vunpack.c.l.b16 %v800
    %v1113 = vunpack.c.h.b16 %v800
    %v1114 = vunpack.c.l.b16 %v801
    %v1115 = vunpack.c.h.b16 %v801
    %v1116 = vunpack.c.l.b16 %v802
    %v1117 = vunpack.c.h.b16 %v802
    %v1118 = vunpack.c.l.b16 %v803
    %v1119 = vunpack.c.h.b16 %v803
    %v1120 = vunpack.c.l.b16 %v804
    %v1121 = vunpack.c.h.b16 %v804
    %v1122 = vunpack.c.l.b16 %v805
    %v1123 = vunpack.c.h.b16 %v805
    %v1124 = vunpack.c.l.b16 %v806
    %v1125 = vunpack.c.h.b16 %v806
    %v1126 = vunpack.c.l.b16 %v807
    %v1127 = vunpack.c.h.b16 %v807
    %v1128 = vunpack.c.l.b16 %v808
    %v1129 = vunpack.c.h.b16 %v808
    %v1130 = vunpack.c.l.b16 %v809
    %v1131 = vunpack.c.h.b16 %v809
    %v1132 = vunpack.c.l.b16 %v810
    %v1133 = vunpack.c.h.b16 %v810
    %v1134 = vunpack.c.l.b16 %v811
    %v1135 = vunpack.c.h.b16 %v811
    %v1136 = vunpack.c.l.b16 %v812
    %v1137 = vunpack.c.h.b16 %v812
    %v1138 = vunpack.c.l.b16 %v813
    %v1139 = vunpack.c.h.b16 %v813
    %v1140 = vunpack.c.l.b16 %v814
    %v1141 = vunpack.c.h.b16 %v814
    %v1142 = vunpack.c.l.b16 %v815
    %v1143 = vunpack.c.h.b16 %v815
    %v1144 = vunpack.c.l.b16 %v816
    %v1145 = vunpack.c.h.b16 %v816
    %v1146 = vunpack.c.l.b16 %v817
    %v1147 = vunpack.c.h.b16 %v817
    %v1148 = vunpack.c.l.b16 %v818
    %v1149 = vunpack.c.h.b16 %v818
    %v1150 = vunpack.c.l.b16 %v819
    %v1151 = vunpack.c.h.b16 %v819
    %v1152 = vunpack.c.l.b16 %v820
    %v1153 = vunpack.c.h.b16 %v820
    %v1154 = vunpack.c.l.b16 %v821
    %v1155 = vunpack.c.h.b16 %v821
    %v1156 = vunpack.c.l.b16 %v822
    %v1157 = vunpack.c.h.b16 %v822
    %v1158 = vunpack.c.l.b16 %v823
    %v1159 = vunpack.c.h.b16 %v823
    %v1160 = vunpack.c.l.b16 %v824
    %v1161 = vunpack.c.h.b16 %v824
    %v1162 = vunpack.c.l.b16 %v825
    %v1163 = vunpack.c.h.b16 %v825
    %v1164 = vunpack.c.l.b16 %v826
    %v1165 = vunpack.c.h.b16 %v826
    %v1166 = vunpack.c.l.b16 %v827
    %v1167 = vunpack.c.h.b16 %v827
    %v1168 = vunpack.c.l.b16 %v828
    %v1169 = vunpack.c.h.b16 %v828
    %v1170 = vunpack.c.l.b16 %v829
    %v1171 = vunpack.c.h.b16 %v829
    %v1172 = vunpack.c.l.b16 %v830
    %v1173 = vunpack.c.h.b16 %v830
    %v1174 = vunpack.c.l.b16 %v831
    %v1175 = vunpack.c.h.b16 %v831
    %v1176 = vunpack.c.l.b16 %v832
    %v1177 = vunpack.c.h.b16 %v832
    %v1178 = vunpack.c.l.b16 %v833
    %v1179 = vunpack.c.h.b16 %v833
    %v1180 = vunpack.c.l.b16 %v834
    %v1181 = vunpack.c.h.b16 %v834
    %v1182 = vunpack.c.l.b16 %v835
    %v1183 = vunpack.c.h.b16 %v835
    %v1184 = vunpack.c.l.b16 %v836
    %v1185 = vunpack.c.h.b16 %v836
    %v1186 = vunpack.c.l.b16 %v837
    %v1187 = vunpack.c.h.b16 %v837
    %v1188 = vunpack.c.l.b16 %v838
    %v1189 = vunpack.c.h.b16 %v838
    %v1190 = vunpack.c.l.b16 %v839
    %v1191 = vunpack.c.h.b16 %v839
    %v1192 = vunpack.c.l.b16 %v840
    %v1193 = vunpack.c.h.b16 %v840
    %v1194 = vunpack.c.l.b16 %v841
    %v1195 = vunpack.c.h.b16 %v841
    %v1196 = vunpack.c.l.b16 %v842
    %v1197 = vunpack.c.h.b16 %v842
    %v1198 = vunpack.c.l.b16 %v843
    %v1199 = vunpack.c.h.b16 %v843
    %v1200 = vunpack.c.l.b16 %v844
    %v1201 = vunpack.c.h.b16 %v844
    %v1202 = vunpack.c.l.b16 %v845
    %v1203 = vunpack.c.h.b16 %v845
    %v1204 = vunpack.c.l.b16 %v846
    %v1205 = vunpack.c.h.b16 %v846
    %v1206 = vunpack.c.l.b16 %v847
    %v1207 = vunpack.c.h.b16 %v847
    %v1208 = vunpack.c.l.b16 %v848
    %v1209 = vunpack.c.h.b16 %v848
    %v1210 = vunpack.c.l.b16 %v849
    %v1211 = vunpack.c.h.b16 %v849
    %v1212 = vunpack.c.l.b16 %v850
    %v1213 = vunpack.c.h.b16 %v850
    %v1214 = vunpack.c.l.b16 %v851
    %v1215 = vunpack.c.h.b16 %v851
    %v1216 = vunpack.c.l.b16 %v852
    %v1217 = vunpack.c.h.b16 %v852
    %v1218 = vunpack.c.l.b16 %v853
    %v1219 = vunpack.c.h.b16 %v853
    %v1220 = vunpack.c.l.b16 %v854
    %v1221 = vunpack.c.h.b16 %v854
    %v1222 = vunpack.c.l.b16 %v855
    %v1223 = vunpack.c.h.b16 %v855
    %v1224 = vunpack.c.l.b16 %v856
    %v1225 = vunpack.c.h.b16 %v856
    %v1226 = vunpack.c.l.b16 %v857
    %v1227 = vunpack.c.h.b16 %v857
    %v1228 = vunpack.c.l.b16 %v858
    %v1229 = vunpack.c.h.b16 %v858
    %v1230 = vunpack.c.l.b16 %v859
    %v1231 = vunpack.c.h.b16 %v859
    %v1232 = vunpack.c.l.b16 %v860
    %v1233 = vunpack.c.h.b16 %v860
    %v1234 = vunpack.c.l.b16 %v861
    %v1235 = vunpack.c.h.b16 %v861
    %v1236 = vunpack.c.l.b16 %v862
    %v1237 = vunpack.c.h.b16 %v862
    %v1238 = vunpack.c.l.b16 %v863
    %v1239 = vunpack.c.h.b16 %v863
    %v1240 = vunpack.c.l.b16 %v864
    %v1241 = vunpack.c.h.b16 %v864
    %v1242 = vunpack.c.l.b16 %v865
    %v1243 = vunpack.c.h.b16 %v865
    %v1244 = vunpack.c.l.b16 %v866
    %v1245 = vunpack.c.h.b16 %v866
    %v1246 = vunpack.c.l.b16 %v867
    %v1247 = vunpack.c.h.b16 %v867
    %v1248 = vunpack.c.l.b16 %v868
    %v1249 = vunpack.c.h.b16 %v868
    %v1250 = vunpack.c.l.b16 %v869
    %v1251 = vunpack.c.h.b16 %v869
    %v1252 = vunpack.c.l.b16 %v870
    %v1253 = vunpack.c.h.b16 %v870
    %v1254 = vunpack.c.l.b16 %v871
    %v1255 = vunpack.c.h.b16 %v871
    %v1256 = vunpack.c.l.b16 %v872
    %v1257 = vunpack.c.h.b16 %v872
    %v1258 = vunpack.c.l.b16 %v873
    %v1259 = vunpack.c.h.b16 %v873
    %v1260 = vunpack.c.l.b16 %v874
    %v1261 = vunpack.c.h.b16 %v874
    %v1262 = vunpack.c.l.b16 %v875
    %v1263 = vunpack.c.h.b16 %v875
    %v1264 = vunpack.c.l.b16 %v876
    %v1265 = vunpack.c.h.b16 %v876
    %v1266 = vunpack.c.l.b16 %v877
    %v1267 = vunpack.c.h.b16 %v877
    %v1268 = vunpack.c.l.b16 %v878
    %v1269 = vunpack.c.h.b16 %v878
    %v1270 = vunpack.c.l.b16 %v879
    %v1271 = vunpack.c.h.b16 %v879
    %v1272 = vunpack.c.l.b16 %v880
    %v1273 = vunpack.c.h.b16 %v880
    %v1274 = vunpack.c.l.b16 %v881
    %v1275 = vunpack.c.h.b16 %v881
    %v1276 = vunpack.c.l.b16 %v882
    %v1277 = vunpack.c.h.b16 %v882
    %v1278 = vunpack.c.l.b16 %v883
    %v1279 = vunpack.c.h.b16 %v883
    %v1280 = vunpack.c.l.b16 %v884
    %v1281 = vunpack.c.h.b16 %v884
    %v1282 = vunpack.c.l.b16 %v885
    %v1283 = vunpack.c.h.b16 %v885
    %v1284 = vunpack.c.l.b16 %v886
    %v1285 = vunpack.c.h.b16 %v886
    %v1286 = vunpack.c.l.b16 %v887
    %v1287 = vunpack.c.h.b16 %v887
    %v1288 = vunpack.c.l.b16 %v888
    %v1289 = vunpack.c.h.b16 %v888
    %v1290 = vunpack.c.l.b16 %v889
    %v1291 = vunpack.c.h.b16 %v889
    %v1292 = vunpack.c.l.b16 %v890
    %v1293 = vunpack.c.h.b16 %v890
    %v1294 = vunpack.c.l.b16 %v891
    %v1295 = vunpack.c.h.b16 %v891
    %v1296 = vunpack.c.l.b16 %v892
    %v1297 = vunpack.c.h.b16 %v892
    %v1298 = vpack.c.b16 %v1046, %v1042
    %v1299 = vpack.c.b16 %v1047, %v1043
    %v1300 = vpack.c.b16 %v1048, %v1044
    %v1301 = vpack.c.b16 %v1049, %v1045
    %v1302 = vpack.c.b16 %v1054, %v1050
    %v1303 = vpack.c.b16 %v1055, %v1051
    %v1304 = vpack.c.b16 %v1056, %v1052
    %v1305 = vpack.c.b16 %v1057, %v1053
    %v1306 = vpack.c.b16 %v1062, %v1058
    %v1307 = vpack.c.b16 %v1063, %v1059
    %v1308 = vpack.c.b16 %v1064, %v1060
    %v1309 = vpack.c.b16 %v1065, %v1061
    %v1310 = vpack.c.b16 %v1070, %v1066
    %v1311 = vpack.c.b16 %v1071, %v1067
    %v1312 = vpack.c.b16 %v1072, %v1068
    %v1313 = vpack.c.b16 %v1073, %v1069
    %v1314 = vpack.c.b16 %v1078, %v1074
    %v1315 = vpack.c.b16 %v1079, %v1075
    %v1316 = vpack.c.b16 %v1080, %v1076
    %v1317 = vpack.c.b16 %v1081, %v1077
    %v1318 = vpack.c.b16 %v1086, %v1082
    %v1319 = vpack.c.b16 %v1087, %v1083
    %v1320 = vpack.c.b16 %v1088, %v1084
    %v1321 = vpack.c.b16 %v1089, %v1085
    %v1322 = vpack.c.b16 %v1094, %v1090
    %v1323 = vpack.c.b16 %v1095, %v1091
    %v1324 = vpack.c.b16 %v1096, %v1092
    %v1325 = vpack.c.b16 %v1097, %v1093
    %v1326 = vpack.c.b16 %v1102, %v1098
    %v1327 = vpack.c.b16 %v1103, %v1099
    %v1328 = vpack.c.b16 %v1104, %v1100
    %v1329 = vpack.c.b16 %v1105, %v1101
    %v1330 = vpack.c.b16 %v1110, %v1106
    %v1331 = vpack.c.b16 %v1111, %v1107
    %v1332 = vpack.c.b16 %v1112, %v1108
    %v1333 = vpack.c.b16 %v1113, %v1109
    %v1334 = vpack.c.b16 %v1118, %v1114
    %v1335 = vpack.c.b16 %v1119, %v1115
    %v1336 = vpack.c.b16 %v1120, %v1116
    %v1337 = vpack.c.b16 %v1121, %v1117
    %v1338 = vpack.c.b16 %v1126, %v1122
    %v1339 = vpack.c.b16 %v1127, %v1123
    %v1340 = vpack.c.b16 %v1128, %v1124
    %v1341 = vpack.c.b16 %v1129, %v1125
    %v1342 = vpack.c.b16 %v1134, %v1130
    %v1343 = vpack.c.b16 %v1135, %v1131
    %v1344 = vpack.c.b16 %v1136, %v1132
    %v1345 = vpack.c.b16 %v1137, %v1133
    %v1346 = vpack.c.b16 %v1142, %v1138
    %v1347 = vpack.c.b16 %v1143, %v1139
    %v1348 = vpack.c.b16 %v1144, %v1140
    %v1349 = vpack.c.b16 %v1145, %v1141
    %v1350 = vpack.c.b16 %v1150, %v1146
    %v1351 = vpack.c.b16 %v1151, %v1147
    %v1352 = vpack.c.b16 %v1152, %v1148
    %v1353 = vpack.c.b16 %v1153, %v1149
    %v1354 = vpack.c.b16 %v1158, %v1154
    %v1355 = vpack.c.b16 %v1159, %v1155
    %v1356 = vpack.c.b16 %v1160, %v1156
    %v1357 = vpack.c.b16 %v1161, %v1157
    %v1358 = vpack.c.b16 %v1166, %v1162
    %v1359 = vpack.c.b16 %v1167, %v1163
    %v1360 = vpack.c.b16 %v1168, %v1164
    %v1361 = vpack.c.b16 %v1169, %v1165
    %v1362 = vpack.c.b16 %v1174, %v1170
    %v1363 = vpack.c.b16 %v1175, %v1171
    %v1364 = vpack.c.b16 %v1176, %v1172
    %v1365 = vpack.c.b16 %v1177, %v1173
    %v1366 = vpack.c.b16 %v1182, %v1178
    %v1367 = vpack.c.b16 %v1183, %v1179
    %v1368 = vpack.c.b16 %v1184, %v1180
    %v1369 = vpack.c.b16 %v1185, %v1181
    %v1370 = vpack.c.b16 %v1190, %v1186
    %v1371 = vpack.c.b16 %v1191, %v1187
    %v1372 = vpack.c.b16 %v1192, %v1188
    %v1373 = vpack.c.b16 %v1193, %v1189
    %v1374 = vpack.c.b16 %v1198, %v1194
    %v1375 = vpack.c.b16 %v1199, %v1195
    %v1376 = vpack.c.b16 %v1200, %v1196
    %v1377 = vpack.c.b16 %v1201, %v1197
    %v1378 = vpack.c.b16 %v1206, %v1202
    %v1379 = vpack.c.b16 %v1207, %v1203
    %v1380 = vpack.c.b16 %v1208, %v1204
    %v1381 = vpack.c.b16 %v1209, %v1205
    %v1382 = vpack.c.b16 %v1214, %v1210
    %v1383 = vpack.c.b16 %v1215, %v1211
    %v1384 = vpack.c.b16 %v1216, %v1212
    %v1385 = vpack.c.b16 %v1217, %v1213
    %v1386 = vpack.c.b16 %v1222, %v1218
    %v1387 = vpack.c.b16 %v1223, %v1219
    %v1388 = vpack.c.b16 %v1224, %v1220
    %v1389 = vpack.c.b16 %v1225, %v1221
    %v1390 = vpack.c.b16 %v1230, %v1226
    %v1391 = vpack.c.b16 %v1231, %v1227
    %v1392 = vpack.c.b16 %v1232, %v1228
    %v1393 = vpack.c.b16 %v1233, %v1229
    %v1394 = vpack.c.b16 %v1238, %v1234
    %v1395 = vpack.c.b16 %v1239, %v1235
    %v1396 = vpack.c.b16 %v1240, %v1236
    %v1397 = vpack.c.b16 %v1241, %v1237
    %v1398 = vpack.c.b16 %v1246, %v1242
    %v1399 = vpack.c.b16 %v1247, %v1243
    %v1400 = vpack.c.b16 %v1248, %v1244
    %v1401 = vpack.c.b16 %v1249, %v1245
    %v1402 = vpack.c.b16 %v1254, %v1250
    %v1403 = vpack.c.b16 %v1255, %v1251
    %v1404 = vpack.c.b16 %v1256, %v1252
    %v1405 = vpack.c.b16 %v1257, %v1253
    %v1406 = vpack.c.b16 %v1262, %v1258
    %v1407 = vpack.c.b16 %v1263, %v1259
    %v1408 = vpack.c.b16 %v1264, %v1260
    %v1409 = vpack.c.b16 %v1265, %v1261
    %v1410 = vpack.c.b16 %v1270, %v1266
    %v1411 = vpack.c.b16 %v1271, %v1267
    %v1412 = vpack.c.b16 %v1272, %v1268
    %v1413 = vpack.c.b16 %v1273, %v1269
    %v1414 = vpack.c.b16 %v1278, %v1274
    %v1415 = vpack.c.b16 %v1279, %v1275
    %v1416 = vpack.c.b16 %v1280, %v1276
    %v1417 = vpack.c.b16 %v1281, %v1277
    %v1418 = vpack.c.b16 %v1286, %v1282
    %v1419 = vpack.c.b16 %v1287, %v1283
    %v1420 = vpack.c.b16 %v1288, %v1284
    %v1421 = vpack.c.b16 %v1289, %v1285
    %v1422 = vpack.c.b16 %v1294, %v1290
    %v1423 = vpack.c.b16 %v1295, %v1291
    %v1424 = vpack.c.b16 %v1296, %v1292
    %v1425 = vpack.c.b16 %v1297, %v1293
    %1554 = vmatprep.subr.bf16.mxu0 %v1299
    %1555 = vmatpush1.bf16.msra.mxu0 %v1298
    %1556 = vmatprep.subr.bf16.mxu0 %v1303
    %1557 = vmatpush1.bf16.msra.mxu0 %v1302
    %1558 = vmatprep.subr.bf16.mxu0 %v1307
    %1559 = vmatpush1.bf16.msra.mxu0 %v1306
    %1560 = vmatprep.subr.bf16.mxu0 %v1311
    %1561 = vmatpush1.bf16.msra.mxu0 %v1310
    %1562 = vmatprep.subr.bf16.mxu0 %v1315
    %1563 = vmatpush1.bf16.msra.mxu0 %v1314
    %1564 = vmatprep.subr.bf16.mxu0 %v1319
    %1565 = vmatpush1.bf16.msra.mxu0 %v1318
    %1566 = vmatprep.subr.bf16.mxu0 %v1323
    %1567 = vmatpush1.bf16.msra.mxu0 %v1322
    %1568 = vmatprep.subr.bf16.mxu0 %v1327
    %1569 = vmatpush1.bf16.msra.mxu0 %v1326
    %1570 = vmatprep.subr.bf16.mxu0 %v1331
    %1571 = vmatpush1.bf16.msra.mxu0 %v1330
    %1572 = vmatprep.subr.bf16.mxu0 %v1335
    %1573 = vmatpush1.bf16.msra.mxu0 %v1334
    %1574 = vmatprep.subr.bf16.mxu0 %v1339
    %1575 = vmatpush1.bf16.msra.mxu0 %v1338
    %1576 = vmatprep.subr.bf16.mxu0 %v1343
    %1577 = vmatpush1.bf16.msra.mxu0 %v1342
    %1578 = vmatprep.subr.bf16.mxu0 %v1347
    %1579 = vmatpush1.bf16.msra.mxu0 %v1346
    %1580 = vmatprep.subr.bf16.mxu0 %v1351
    %1581 = vmatpush1.bf16.msra.mxu0 %v1350
    %1582 = vmatprep.subr.bf16.mxu0 %v1355
    %1583 = vmatpush1.bf16.msra.mxu0 %v1354
    %1584 = vmatprep.subr.bf16.mxu0 %v1359
    %1585 = vmatpush1.bf16.msra.mxu0 %v1358
    %1586 = vmatprep.mubr.bf16.mxu0 %v762
    %1587 = vmatmul.mubr.bf16.gmra.mrb[0].mxu0 %v761
    %v1588 = vpop.f32.mrb[0].mxu0
    %v1589 = vadd.f32 %v897, %v1588
    %v1590 = vpop.f32.mrb[0].mxu0
    %v1591 = vadd.f32 %v901, %v1590
    %v1592 = vpop.f32.mrb[0].mxu0
    %v1593 = vpop.f32.mrb[0].mxu0
    %1594 = vdwg.mxu0
    %1595 = vmatprep.subr.bf16.mxu0 %v1363
    %1596 = vmatpush1.bf16.msra.mxu0 %v1362
    %1597 = vmatprep.subr.bf16.mxu0 %v1367
    %1598 = vmatpush1.bf16.msra.mxu0 %v1366
    %1599 = vmatprep.subr.bf16.mxu0 %v1371
    %1600 = vmatpush1.bf16.msra.mxu0 %v1370
    %1601 = vmatprep.subr.bf16.mxu0 %v1375
    %1602 = vmatpush1.bf16.msra.mxu0 %v1374
    %1603 = vmatprep.subr.bf16.mxu0 %v1379
    %1604 = vmatpush1.bf16.msra.mxu0 %v1378
    %1605 = vmatprep.subr.bf16.mxu0 %v1383
    %1606 = vmatpush1.bf16.msra.mxu0 %v1382
    %1607 = vmatprep.subr.bf16.mxu0 %v1387
    %1608 = vmatpush1.bf16.msra.mxu0 %v1386
    %1609 = vmatprep.subr.bf16.mxu0 %v1391
    %1610 = vmatpush1.bf16.msra.mxu0 %v1390
    %1611 = vmatprep.subr.bf16.mxu0 %v1395
    %1612 = vmatpush1.bf16.msra.mxu0 %v1394
    %1613 = vmatprep.subr.bf16.mxu0 %v1399
    %1614 = vmatpush1.bf16.msra.mxu0 %v1398
    %1615 = vmatprep.subr.bf16.mxu0 %v1403
    %1616 = vmatpush1.bf16.msra.mxu0 %v1402
    %1617 = vmatprep.subr.bf16.mxu0 %v1407
    %1618 = vmatpush1.bf16.msra.mxu0 %v1406
    %1619 = vmatprep.subr.bf16.mxu0 %v1411
    %1620 = vmatpush1.bf16.msra.mxu0 %v1410
    %1621 = vmatprep.subr.bf16.mxu0 %v1415
    %1622 = vmatpush1.bf16.msra.mxu0 %v1414
    %1623 = vmatprep.subr.bf16.mxu0 %v1419
    %1624 = vmatpush1.bf16.msra.mxu0 %v1418
    %1625 = vmatprep.subr.bf16.mxu0 %v1423
    %1626 = vmatpush1.bf16.msra.mxu0 %v1422
    %1627 = vmatprep.mubr.bf16.mxu0 %v764
    %1628 = vmatmul.mubr.bf16.gmra.mrb[0].mxu0 %v763
    %v1629 = vpop.f32.mrb[0].mxu0
    %v1630 = vadd.f32 %v1589, %v1629
    %v1631 = vpop.f32.mrb[0].mxu0
    %v1632 = vadd.f32 %v1591, %v1631
    %v1633 = vpop.f32.mrb[0].mxu0
    %v1634 = vpop.f32.mrb[0].mxu0
    %1635 = vdwg.mxu0
    %1636 = vmatprep.subr.bf16.mxu0 %v1301
    %1637 = vmatpush1.bf16.msra.mxu0 %v1300
    %1638 = vmatprep.subr.bf16.mxu0 %v1305
    %1639 = vmatpush1.bf16.msra.mxu0 %v1304
    %1640 = vmatprep.subr.bf16.mxu0 %v1309
    %1641 = vmatpush1.bf16.msra.mxu0 %v1308
    %1642 = vmatprep.subr.bf16.mxu0 %v1313
    %1643 = vmatpush1.bf16.msra.mxu0 %v1312
    %1644 = vmatprep.subr.bf16.mxu0 %v1317
    %1645 = vmatpush1.bf16.msra.mxu0 %v1316
    %1646 = vmatprep.subr.bf16.mxu0 %v1321
    %1647 = vmatpush1.bf16.msra.mxu0 %v1320
    %1648 = vmatprep.subr.bf16.mxu0 %v1325
    %1649 = vmatpush1.bf16.msra.mxu0 %v1324
    %1650 = vmatprep.subr.bf16.mxu0 %v1329
    %1651 = vmatpush1.bf16.msra.mxu0 %v1328
    %1652 = vmatprep.subr.bf16.mxu0 %v1333
    %1653 = vmatpush1.bf16.msra.mxu0 %v1332
    %1654 = vmatprep.subr.bf16.mxu0 %v1337
    %1655 = vmatpush1.bf16.msra.mxu0 %v1336
    %1656 = vmatprep.subr.bf16.mxu0 %v1341
    %1657 = vmatpush1.bf16.msra.mxu0 %v1340
    %1658 = vmatprep.subr.bf16.mxu0 %v1345
    %1659 = vmatpush1.bf16.msra.mxu0 %v1344
    %1660 = vmatprep.subr.bf16.mxu0 %v1349
    %1661 = vmatpush1.bf16.msra.mxu0 %v1348
    %1662 = vmatprep.subr.bf16.mxu0 %v1353
    %1663 = vmatpush1.bf16.msra.mxu0 %v1352
    %1664 = vmatprep.subr.bf16.mxu0 %v1357
    %1665 = vmatpush1.bf16.msra.mxu0 %v1356
    %1666 = vmatprep.subr.bf16.mxu0 %v1361
    %1667 = vmatpush1.bf16.msra.mxu0 %v1360
    %1668 = vmatprep.mubr.bf16.mxu0 %v762
    %1669 = vmatmul.mubr.bf16.gmra.mrb[0].mxu0 %v761
    %v1670 = vpop.f32.mrb[0].mxu0
    %v1671 = vadd.f32 %v905, %v1670
    %v1672 = vpop.f32.mrb[0].mxu0
    %v1673 = vadd.f32 %v909, %v1672
    %v1674 = vpop.f32.mrb[0].mxu0
    %v1675 = vpop.f32.mrb[0].mxu0
    %1676 = vdwg.mxu0
    %1677 = vmatprep.subr.bf16.mxu0 %v1365
    %1678 = vmatpush1.bf16.msra.mxu0 %v1364
    %1679 = vmatprep.subr.bf16.mxu0 %v1369
    %1680 = vmatpush1.bf16.msra.mxu0 %v1368
    %1681 = vmatprep.subr.bf16.mxu0 %v1373
    %1682 = vmatpush1.bf16.msra.mxu0 %v1372
    %1683 = vmatprep.subr.bf16.mxu0 %v1377
    %1684 = vmatpush1.bf16.msra.mxu0 %v1376
    %1685 = vmatprep.subr.bf16.mxu0 %v1381
    %1686 = vmatpush1.bf16.msra.mxu0 %v1380
    %1687 = vmatprep.subr.bf16.mxu0 %v1385
    %1688 = vmatpush1.bf16.msra.mxu0 %v1384
    %1689 = vmatprep.subr.bf16.mxu0 %v1389
    %1690 = vmatpush1.bf16.msra.mxu0 %v1388
    %1691 = vmatprep.subr.bf16.mxu0 %v1393
    %1692 = vmatpush1.bf16.msra.mxu0 %v1392
    %1693 = vmatprep.subr.bf16.mxu0 %v1397
    %1694 = vmatpush1.bf16.msra.mxu0 %v1396
    %1695 = vmatprep.subr.bf16.mxu0 %v1401
    %1696 = vmatpush1.bf16.msra.mxu0 %v1400
    %1697 = vmatprep.subr.bf16.mxu0 %v1405
    %1698 = vmatpush1.bf16.msra.mxu0 %v1404
    %1699 = vmatprep.subr.bf16.mxu0 %v1409
    %1700 = vmatpush1.bf16.msra.mxu0 %v1408
    %1701 = vmatprep.subr.bf16.mxu0 %v1413
    %1702 = vmatpush1.bf16.msra.mxu0 %v1412
    %1703 = vmatprep.subr.bf16.mxu0 %v1417
    %1704 = vmatpush1.bf16.msra.mxu0 %v1416
    %1705 = vmatprep.subr.bf16.mxu0 %v1421
    %1706 = vmatpush1.bf16.msra.mxu0 %v1420
    %1707 = vmatprep.subr.bf16.mxu0 %v1425
    %1708 = vmatpush1.bf16.msra.mxu0 %v1424
    %1709 = vmatprep.mubr.bf16.mxu0 %v764
    %1710 = vmatmul.mubr.bf16.gmra.mrb[0].mxu0 %v763
    %v1711 = vpop.f32.mrb[0].mxu0
    %v1712 = vadd.f32 %v1671, %v1711
    %v1713 = vpop.f32.mrb[0].mxu0
    %v1714 = vadd.f32 %v1673, %v1713
    %v1715 = vpop.f32.mrb[0].mxu0
    %v1716 = vpop.f32.mrb[0].mxu0
    %1717 = vdwg.mxu0
    %v1718 = vmax.f32 %v1630, 0.0
    %v1719 = vmax.f32 %v1632, 0.0
    %v1720 = vmax.f32 %v1712, 0.0
    %v1721 = vmax.f32 %v1714, 0.0
    %v1722 = vpack.c.bf16 %v1718, %v1718
    %v1723 = vpack.c.bf16 %v1719, %v1719
    %v1724 = vpack.c.bf16 %v1720, %v1720
    %v1725 = vpack.c.bf16 %v1721, %v1721
    %v1726 = vld [vmem:[#allocation2 + $0x10] sm:$0xf]
    %v1727 = vld [vmem:[#allocation2 + $0x14] sm:$0xf]
    %v1728 = vld [vmem:[#allocation2 + $0x18] sm:$0xf]
    %v1729 = vld [vmem:[#allocation2 + $0x1c] sm:$0xf]
    %v1730 = vld [vmem:[#allocation2 + $0x20] sm:$0xf]
    %v1731 = vld [vmem:[#allocation2 + $0x24] sm:$0xf]
    %v1732 = vld [vmem:[#allocation2 + $0x28] sm:$0xf]
    %v1733 = vld [vmem:[#allocation2 + $0x2c] sm:$0xf]
    %v1734 = vld [vmem:[#allocation2 + $0x30] sm:$0xf]
    %v1735 = vld [vmem:[#allocation2 + $0x34] sm:$0xf]
    %v1736 = vld [vmem:[#allocation2 + $0x38] sm:$0xf]
    %v1737 = vld [vmem:[#allocation2 + $0x3c] sm:$0xf]
    %v1738 = vld [vmem:[#allocation2 + $0x40] sm:$0xf]
    %v1739 = vld [vmem:[#allocation2 + $0x44] sm:$0xf]
    %v1740 = vld [vmem:[#allocation2 + $0x48] sm:$0xf]
    %v1741 = vld [vmem:[#allocation2 + $0x4c] sm:$0xf]
    %v1742 = vld [vmem:[#allocation2 + $0x50] sm:$0xf]
    %v1743 = vld [vmem:[#allocation2 + $0x54] sm:$0xf]
    %v1744 = vld [vmem:[#allocation2 + $0x58] sm:$0xf]
    %v1745 = vld [vmem:[#allocation2 + $0x5c] sm:$0xf]
    %v1746 = vld [vmem:[#allocation2 + $0x60] sm:$0xf]
    %v1747 = vld [vmem:[#allocation2 + $0x64] sm:$0xf]
    %v1748 = vld [vmem:[#allocation2 + $0x68] sm:$0xf]
    %v1749 = vld [vmem:[#allocation2 + $0x6c] sm:$0xf]
    %v1750 = vld [vmem:[#allocation2 + $0x70] sm:$0xf]
    %v1751 = vld [vmem:[#allocation2 + $0x74] sm:$0xf]
    %v1752 = vld [vmem:[#allocation2 + $0x78] sm:$0xf]
    %v1753 = vld [vmem:[#allocation2 + $0x7c] sm:$0xf]
    %v1754 = vld [vmem:[#allocation2 + $0x80] sm:$0xf]
    %v1755 = vld [vmem:[#allocation2 + $0x84] sm:$0xf]
    %v1756 = vld [vmem:[#allocation2 + $0x88] sm:$0xf]
    %v1757 = vld [vmem:[#allocation2 + $0x8c] sm:$0xf]
    %v1758 = vld [vmem:[#allocation2 + $0x90] sm:$0xf]
    %v1759 = vld [vmem:[#allocation2 + $0x94] sm:$0xf]
    %v1760 = vld [vmem:[#allocation2 + $0x98] sm:$0xf]
    %v1761 = vld [vmem:[#allocation2 + $0x9c] sm:$0xf]
    %v1762 = vld [vmem:[#allocation2 + $0xa0] sm:$0xf]
    %v1763 = vld [vmem:[#allocation2 + $0xa4] sm:$0xf]
    %v1764 = vld [vmem:[#allocation2 + $0xa8] sm:$0xf]
    %v1765 = vld [vmem:[#allocation2 + $0xac] sm:$0xf]
    %v1766 = vld [vmem:[#allocation2 + $0xb0] sm:$0xf]
    %v1767 = vld [vmem:[#allocation2 + $0xb4] sm:$0xf]
    %v1768 = vld [vmem:[#allocation2 + $0xb8] sm:$0xf]
    %v1769 = vld [vmem:[#allocation2 + $0xbc] sm:$0xf]
    %v1770 = vld [vmem:[#allocation2 + $0xc0] sm:$0xf]
    %v1771 = vld [vmem:[#allocation2 + $0xc4] sm:$0xf]
    %v1772 = vld [vmem:[#allocation2 + $0xc8] sm:$0xf]
    %v1773 = vld [vmem:[#allocation2 + $0xcc] sm:$0xf]
    %v1774 = vld [vmem:[#allocation2 + $0xd0] sm:$0xf]
    %v1775 = vld [vmem:[#allocation2 + $0xd4] sm:$0xf]
    %v1776 = vld [vmem:[#allocation2 + $0xd8] sm:$0xf]
    %v1777 = vld [vmem:[#allocation2 + $0xdc] sm:$0xf]
    %v1778 = vld [vmem:[#allocation2 + $0xe0] sm:$0xf]
    %v1779 = vld [vmem:[#allocation2 + $0xe4] sm:$0xf]
    %v1780 = vld [vmem:[#allocation2 + $0xe8] sm:$0xf]
    %v1781 = vld [vmem:[#allocation2 + $0xec] sm:$0xf]
    %v1782 = vld [vmem:[#allocation2 + $0xf0] sm:$0xf]
    %v1783 = vld [vmem:[#allocation2 + $0xf4] sm:$0xf]
    %v1784 = vld [vmem:[#allocation2 + $0xf8] sm:$0xf]
    %v1785 = vld [vmem:[#allocation2 + $0xfc] sm:$0xf]
    %v1786 = vld [vmem:[#allocation2 + $0x100] sm:$0xf]
    %v1787 = vld [vmem:[#allocation2 + $0x104] sm:$0xf]
    %v1788 = vld [vmem:[#allocation2 + $0x108] sm:$0xf]
    %v1789 = vld [vmem:[#allocation2 + $0x10c] sm:$0xf]
    %v1854 = vunpack.c.l.b16 %v1726
    %v1855 = vunpack.c.l.b16 %v1727
    %v1856 = vunpack.c.l.b16 %v1728
    %v1857 = vunpack.c.l.b16 %v1729
    %v1858 = vunpack.c.l.b16 %v1730
    %v1859 = vunpack.c.l.b16 %v1731
    %v1860 = vunpack.c.l.b16 %v1732
    %v1861 = vunpack.c.l.b16 %v1733
    %v1862 = vunpack.c.l.b16 %v1734
    %v1863 = vunpack.c.l.b16 %v1735
    %v1864 = vunpack.c.l.b16 %v1736
    %v1865 = vunpack.c.l.b16 %v1737
    %v1866 = vunpack.c.l.b16 %v1738
    %v1867 = vunpack.c.l.b16 %v1739
    %v1868 = vunpack.c.l.b16 %v1740
    %v1869 = vunpack.c.l.b16 %v1741
    %v1870 = vunpack.c.l.b16 %v1742
    %v1871 = vunpack.c.l.b16 %v1743
    %v1872 = vunpack.c.l.b16 %v1744
    %v1873 = vunpack.c.l.b16 %v1745
    %v1874 = vunpack.c.l.b16 %v1746
    %v1875 = vunpack.c.l.b16 %v1747
    %v1876 = vunpack.c.l.b16 %v1748
    %v1877 = vunpack.c.l.b16 %v1749
    %v1878 = vunpack.c.l.b16 %v1750
    %v1879 = vunpack.c.l.b16 %v1751
    %v1880 = vunpack.c.l.b16 %v1752
    %v1881 = vunpack.c.l.b16 %v1753
    %v1882 = vunpack.c.l.b16 %v1754
    %v1883 = vunpack.c.l.b16 %v1755
    %v1884 = vunpack.c.l.b16 %v1756
    %v1885 = vunpack.c.l.b16 %v1757
    %v1886 = vunpack.c.l.b16 %v1758
    %v1887 = vunpack.c.l.b16 %v1759
    %v1888 = vunpack.c.l.b16 %v1760
    %v1889 = vunpack.c.l.b16 %v1761
    %v1890 = vunpack.c.l.b16 %v1762
    %v1891 = vunpack.c.l.b16 %v1763
    %v1892 = vunpack.c.l.b16 %v1764
    %v1893 = vunpack.c.l.b16 %v1765
    %v1894 = vunpack.c.l.b16 %v1766
    %v1895 = vunpack.c.l.b16 %v1767
    %v1896 = vunpack.c.l.b16 %v1768
    %v1897 = vunpack.c.l.b16 %v1769
    %v1898 = vunpack.c.l.b16 %v1770
    %v1899 = vunpack.c.l.b16 %v1771
    %v1900 = vunpack.c.l.b16 %v1772
    %v1901 = vunpack.c.l.b16 %v1773
    %v1902 = vunpack.c.l.b16 %v1774
    %v1903 = vunpack.c.l.b16 %v1775
    %v1904 = vunpack.c.l.b16 %v1776
    %v1905 = vunpack.c.l.b16 %v1777
    %v1906 = vunpack.c.l.b16 %v1778
    %v1907 = vunpack.c.l.b16 %v1779
    %v1908 = vunpack.c.l.b16 %v1780
    %v1909 = vunpack.c.l.b16 %v1781
    %v1910 = vunpack.c.l.b16 %v1782
    %v1911 = vunpack.c.l.b16 %v1783
    %v1912 = vunpack.c.l.b16 %v1784
    %v1913 = vunpack.c.l.b16 %v1785
    %v1914 = vunpack.c.l.b16 %v1786
    %v1915 = vunpack.c.l.b16 %v1787
    %v1916 = vunpack.c.l.b16 %v1788
    %v1917 = vunpack.c.l.b16 %v1789
    %v1918 = vpack.c.b16 %v1855, %v1854
    %v1919 = vpack.c.b16 %v1857, %v1856
    %v1920 = vpack.c.b16 %v1859, %v1858
    %v1921 = vpack.c.b16 %v1861, %v1860
    %v1922 = vpack.c.b16 %v1863, %v1862
    %v1923 = vpack.c.b16 %v1865, %v1864
    %v1924 = vpack.c.b16 %v1867, %v1866
    %v1925 = vpack.c.b16 %v1869, %v1868
    %v1926 = vpack.c.b16 %v1871, %v1870
    %v1927 = vpack.c.b16 %v1873, %v1872
    %v1928 = vpack.c.b16 %v1875, %v1874
    %v1929 = vpack.c.b16 %v1877, %v1876
    %v1930 = vpack.c.b16 %v1879, %v1878
    %v1931 = vpack.c.b16 %v1881, %v1880
    %v1932 = vpack.c.b16 %v1883, %v1882
    %v1933 = vpack.c.b16 %v1885, %v1884
    %v1934 = vpack.c.b16 %v1887, %v1886
    %v1935 = vpack.c.b16 %v1889, %v1888
    %v1936 = vpack.c.b16 %v1891, %v1890
    %v1937 = vpack.c.b16 %v1893, %v1892
    %v1938 = vpack.c.b16 %v1895, %v1894
    %v1939 = vpack.c.b16 %v1897, %v1896
    %v1940 = vpack.c.b16 %v1899, %v1898
    %v1941 = vpack.c.b16 %v1901, %v1900
    %v1942 = vpack.c.b16 %v1903, %v1902
    %v1943 = vpack.c.b16 %v1905, %v1904
    %v1944 = vpack.c.b16 %v1907, %v1906
    %v1945 = vpack.c.b16 %v1909, %v1908
    %v1946 = vpack.c.b16 %v1911, %v1910
    %v1947 = vpack.c.b16 %v1913, %v1912
    %v1948 = vpack.c.b16 %v1915, %v1914
    %v1949 = vpack.c.b16 %v1917, %v1916
    %1982 = vmatprep.subr.bf16.mxu0 0
    %1983 = vmatpush1.bf16.msra.mxu0 %v1918
    %1984 = vmatprep.subr.bf16.mxu0 0
    %1985 = vmatpush1.bf16.msra.mxu0 %v1919
    %1986 = vmatprep.subr.bf16.mxu0 0
    %1987 = vmatpush1.bf16.msra.mxu0 %v1920
    %1988 = vmatprep.subr.bf16.mxu0 0
    %1989 = vmatpush1.bf16.msra.mxu0 %v1921
    %1990 = vmatprep.subr.bf16.mxu0 0
    %1991 = vmatpush1.bf16.msra.mxu0 %v1922
    %1992 = vmatprep.subr.bf16.mxu0 0
    %1993 = vmatpush1.bf16.msra.mxu0 %v1923
    %1994 = vmatprep.subr.bf16.mxu0 0
    %1995 = vmatpush1.bf16.msra.mxu0 %v1924
    %1996 = vmatprep.subr.bf16.mxu0 0
    %1997 = vmatpush1.bf16.msra.mxu0 %v1925
    %1998 = vmatprep.subr.bf16.mxu0 0
    %1999 = vmatpush1.bf16.msra.mxu0 %v1926
    %2000 = vmatprep.subr.bf16.mxu0 0
    %2001 = vmatpush1.bf16.msra.mxu0 %v1927
    %2002 = vmatprep.subr.bf16.mxu0 0
    %2003 = vmatpush1.bf16.msra.mxu0 %v1928
    %2004 = vmatprep.subr.bf16.mxu0 0
    %2005 = vmatpush1.bf16.msra.mxu0 %v1929
    %2006 = vmatprep.subr.bf16.mxu0 0
    %2007 = vmatpush1.bf16.msra.mxu0 %v1930
    %2008 = vmatprep.subr.bf16.mxu0 0
    %2009 = vmatpush1.bf16.msra.mxu0 %v1931
    %2010 = vmatprep.subr.bf16.mxu0 0
    %2011 = vmatpush1.bf16.msra.mxu0 %v1932
    %2012 = vmatprep.subr.bf16.mxu0 0
    %2013 = vmatpush1.bf16.msra.mxu0 %v1933
    %2014 = vmatprep.mubr.bf16.mxu0 %v1723
    %2015 = vmatmul.mubr.bf16.gmra.mrb[0].mxu0 %v1722
    %v2016 = vpop.f32.mrb[0].mxu0
    %v2017 = vadd.f32 %v53, %v2016
    %v2018 = vpop.f32.mrb[0].mxu0
    %v2019 = vpop.f32.mrb[0].mxu0
    %v2020 = vpop.f32.mrb[0].mxu0
    %2021 = vdwg.mxu0
    %2022 = vmatprep.subr.bf16.mxu0 0
    %2023 = vmatpush1.bf16.msra.mxu0 %v1934
    %2024 = vmatprep.subr.bf16.mxu0 0
    %2025 = vmatpush1.bf16.msra.mxu0 %v1935
    %2026 = vmatprep.subr.bf16.mxu0 0
    %2027 = vmatpush1.bf16.msra.mxu0 %v1936
    %2028 = vmatprep.subr.bf16.mxu0 0
    %2029 = vmatpush1.bf16.msra.mxu0 %v1937
    %2030 = vmatprep.subr.bf16.mxu0 0
    %2031 = vmatpush1.bf16.msra.mxu0 %v1938
    %2032 = vmatprep.subr.bf16.mxu0 0
    %2033 = vmatpush1.bf16.msra.mxu0 %v1939
    %2034 = vmatprep.subr.bf16.mxu0 0
    %2035 = vmatpush1.bf16.msra.mxu0 %v1940
    %2036 = vmatprep.subr.bf16.mxu0 0
    %2037 = vmatpush1.bf16.msra.mxu0 %v1941
    %2038 = vmatprep.subr.bf16.mxu0 0
    %2039 = vmatpush1.bf16.msra.mxu0 %v1942
    %2040 = vmatprep.subr.bf16.mxu0 0
    %2041 = vmatpush1.bf16.msra.mxu0 %v1943
    %2042 = vmatprep.subr.bf16.mxu0 0
    %2043 = vmatpush1.bf16.msra.mxu0 %v1944
    %2044 = vmatprep.subr.bf16.mxu0 0
    %2045 = vmatpush1.bf16.msra.mxu0 %v1945
    %2046 = vmatprep.subr.bf16.mxu0 0
    %2047 = vmatpush1.bf16.msra.mxu0 %v1946
    %2048 = vmatprep.subr.bf16.mxu0 0
    %2049 = vmatpush1.bf16.msra.mxu0 %v1947
    %2050 = vmatprep.subr.bf16.mxu0 0
    %2051 = vmatpush1.bf16.msra.mxu0 %v1948
    %2052 = vmatprep.subr.bf16.mxu0 0
    %2053 = vmatpush1.bf16.msra.mxu0 %v1949
    %2054 = vmatprep.mubr.bf16.mxu0 %v1725
    %2055 = vmatmul.mubr.bf16.gmra.mrb[0].mxu0 %v1724
    %v2056 = vpop.f32.mrb[0].mxu0
    %v2057 = vadd.f32 %v2017, %v2056
    %v2058 = vpop.f32.mrb[0].mxu0
    %v2059 = vpop.f32.mrb[0].mxu0
    %v2060 = vpop.f32.mrb[0].mxu0
    %2061 = vdwg.mxu0
    %v2062 = vsub.f32 0.0, %v2057
    %v2063 = vmul.f32 %v2062, 1.442695
    %v2064 = vpow.pop %v2063
    %v2065 = vadd.f32 %v2064, 1.0
    %v2066 = vrcp.pop %v2065
    %2067 = vst [vmem:[%s4] sm:$0xff] %v2066
    // Predicated region
    $region26: #{alignment_detector_forward.1} parent=1 // pred_check
      _
    $region27: #{alignment_detector_forward.1} parent=1 // pred_check_branch
      %2069 = sbr.rel (0) target = $region29
    $region28: #{alignment_detector_forward.1} parent=1 // pred_region
      _
    $region29: #{alignment_detector_forward.1} parent=1 // pred_fallthru
      _
    // Predicated region
    $region30: #{alignment_detector_forward.1} parent=1 // pred_check
      _
    $region31: #{alignment_detector_forward.1} parent=1 // pred_check_branch
      %2071 = sbr.rel (0) target = $region33
    $region32: #{alignment_detector_forward.1} parent=1 // pred_region
      _
    $region33: #{alignment_detector_forward.1} parent=1 // pred_fallthru
      _
    %2072 = vsyncpa [#allocation3], 1
    %2073 = vsyncpa [#allocation5], 1

</llo_original>
